<compile_context>
chip_gen: v7x
topology: tpu7x:2x2x1
jax: 0.10.0
libtpu: 0.0.40
codegen_flags: <defaults>
</compile_context>

<pallas_src>
import functools

import jax
import jax.numpy as jnp
from jax.experimental import pallas as pl
from jax.experimental.pallas import tpu as pltpu

INPUT_DIM = 4      # ['iq', 'id', 'vd', 'vq']
HIDDEN_DIM = 16
OUTPUT_DIM = 2     # ['torque', 'speed']
NUM_LAYERS = 2
FC_PAD = 128       # lane-dense FC head width
SUBLANE = 8        # batch padded to a multiple of this


def _lstm_kernel(x_ref,       # (T*B, D)   time-major, batch already padded to B
                 wih1_ref,    # (D, 4H)
                 whh1_ref,    # (H, 4H)
                 b1_ref,      # (1, 4H)    b_ih_l0 + b_hh_l0
                 wih2_ref,    # (H, 4H)
                 whh2_ref,    # (H, 4H)
                 b2_ref,      # (1, 4H)    b_ih_l1 + b_hh_l1
                 wfc_ref,     # (H, FC_PAD) zero-padded beyond OUTPUT_DIM
                 bfc_ref,     # (1, FC_PAD)
                 out_ref,     # (B, FC_PAD)
                 *, B, T):
    H = HIDDEN_DIM

    # Hoist recurrent weight loads out of the unrolled loop.
    whh1 = whh1_ref[...]
    wih2 = wih2_ref[...]
    whh2 = whh2_ref[...]

    # ---- layer-1 input projection for ALL timesteps in one MXU push (bias folded in) ----
    xg_all = (jnp.dot(x_ref[...], wih1_ref[...], preferred_element_type=jnp.float32)
              + jnp.broadcast_to(b1_ref[...], (T * B, 4 * H)))        # (T*B, 4H)

    # Hoisted layer-2 bias broadcast (one broadcast total, not T of them).
    b2 = jnp.broadcast_to(b2_ref[...], (B, 4 * H))

    # Single-transcendental activation over the full (B, 4H) gates vreg:
    #   g lanes (2H..3H): tanh(x);  other lanes: sigmoid(x) = 0.5 * tanh(0.5 * x) + 0.5.
    lane = jax.lax.broadcasted_iota(jnp.int32, (B, 4 * H), 1)
    is_g = (lane >= 2 * H) & (lane < 3 * H)
    g_scale = jnp.where(is_g, 1.0, 0.5).astype(jnp.float32)   # pre-scale == post-scale
    g_shift = jnp.where(is_g, 0.0, 0.5).astype(jnp.float32)

    def activate(gates):
        t = jnp.tanh(gates * g_scale)          # one EUP push per activation
        return g_scale * t + g_shift           # cheap VPU filler

    h1 = jnp.zeros((B, H), jnp.float32)
    c1 = jnp.zeros((B, H), jnp.float32)
    h2 = jnp.zeros((B, H), jnp.float32)
    c2 = jnp.zeros((B, H), jnp.float32)

    # Fully unrolled recurrence (T is a small compile-time constant); states stay in vregs.
    # TODO(synk): for large T use lax.fori_loop(..., unroll=8); for bf16 MXU inputs on v6e/v7x
    # cast only the dot operands and loosen the tolerance.
    for t in range(T):
        # ---- layer 1: only h1 @ Whh1 is on the serial chain ----
        gates1 = (xg_all[t * B:(t + 1) * B, :]
                  + jnp.dot(h1, whh1, preferred_element_type=jnp.float32))
        a1 = activate(gates1)
        c1 = a1[:, H:2 * H] * c1 + a1[:, :H] * a1[:, 2 * H:3 * H]
        h1 = a1[:, 3 * H:] * jnp.tanh(c1)

        # ---- layer 2: two back-to-back MXU pushes, no per-step concat ----
        gates2 = (jnp.dot(h1, wih2, preferred_element_type=jnp.float32)
                  + jnp.dot(h2, whh2, preferred_element_type=jnp.float32)
                  + b2)
        a2 = activate(gates2)
        c2 = a2[:, H:2 * H] * c2 + a2[:, :H] * a2[:, 2 * H:3 * H]
        h2 = a2[:, 3 * H:] * jnp.tanh(c2)

    # ---- FC head on the final hidden state: dense (B_pad, 128) store ----
    out_ref[...] = (jnp.dot(h2, wfc_ref[...], preferred_element_type=jnp.float32)
                    + jnp.broadcast_to(bfc_ref[...], (B, FC_PAD)))


def pack_params(params):
    """One-time repack (NOT per forward): lane-pad the FC head to 128."""
    (wih1, whh1, b1, wih2, whh2, b2, wfc, bfc) = params
    wfc_p = jnp.pad(wfc, ((0, 0), (0, FC_PAD - OUTPUT_DIM)))
    bfc_p = jnp.pad(bfc, ((0, 0), (0, FC_PAD - OUTPUT_DIM)))
    return (wih1, whh1, b1, wih2, whh2, b2, wfc_p, bfc_p)


@jax.jit
def lstm_model_forward(x, packed_params):
    """x: (B, T, INPUT_DIM) float32 -> (B, OUTPUT_DIM) float32."""
    B, T, D = x.shape
    (wih1, whh1, b1, wih2, whh2, b2, wfc_p, bfc_p) = packed_params

    # Sublane-pad the batch and go time-major so every per-step slice inside the kernel is an
    # aligned 8-row block and the output store is dense.
    B_pad = max(SUBLANE, ((B + SUBLANE - 1) // SUBLANE) * SUBLANE)
    x_p = jnp.pad(x, ((0, B_pad - B), (0, 0), (0, 0)))
    x_flat = jnp.transpose(x_p, (1, 0, 2)).reshape(T * B_pad, D)

    vmem = pl.BlockSpec(memory_space=pltpu.MemorySpace.VMEM)
    out = pl.pallas_call(
        functools.partial(_lstm_kernel, B=B_pad, T=T),
        out_shape=jax.ShapeDtypeStruct((B_pad, FC_PAD), jnp.float32),
        in_specs=[vmem] * 9,
        out_specs=vmem,
    )(x_flat, wih1, whh1, b1, wih2, whh2, b2, wfc_p, bfc_p)
    return out[:B, :OUTPUT_DIM]


def init_params(key):
    """Same shapes/init range as torch nn.LSTM(4,16,2,batch_first=True) + Linear(16,2).
    Weights stored pre-transposed (in_features, out_features); gate order i,f,g,o."""
    H, D, O = HIDDEN_DIM, INPUT_DIM, OUTPUT_DIM
    k = 1.0 / jnp.sqrt(H)
    ks = jax.random.split(key, 10)
    u = lambda kk, shape: jax.random.uniform(kk, shape, jnp.float32, -k, k)
    wih1 = u(ks[0], (D, 4 * H))                          # == weight_ih_l0.T
    whh1 = u(ks[1], (H, 4 * H))                          # == weight_hh_l0.T
    b1 = u(ks[2], (1, 4 * H)) + u(ks[3], (1, 4 * H))     # b_ih_l0 + b_hh_l0
    wih2 = u(ks[4], (H, 4 * H))                          # == weight_ih_l1.T
    whh2 = u(ks[5], (H, 4 * H))                          # == weight_hh_l1.T
    b2 = u(ks[6], (1, 4 * H)) + u(ks[7], (1, 4 * H))     # b_ih_l1 + b_hh_l1
    wfc = u(ks[8], (H, O))                               # == fc.weight.T
    bfc = u(ks[9], (1, O))                               # == fc.bias
    return (wih1, whh1, b1, wih2, whh2, b2, wfc, bfc)


def reference_forward(x, params):
    """Pure-JAX reference mirroring torch LSTM gate math (gate order i,f,g,o)."""
    (wih1, whh1, b1, wih2, whh2, b2, wfc, bfc) = params
    B, T, _ = x.shape
    H = HIDDEN_DIM

    def cell(x_t, h, c, wih, whh, b):
        g = x_t @ wih + h @ whh + b
        i = jax.nn.sigmoid(g[:, 0 * H:1 * H])
        f = jax.nn.sigmoid(g[:, 1 * H:2 * H])
        gg = jnp.tanh(g[:, 2 * H:3 * H])
        o = jax.nn.sigmoid(g[:, 3 * H:4 * H])
        c_new = f * c + i * gg
        h_new = o * jnp.tanh(c_new)
        return h_new, c_new

    h1 = c1 = h2 = c2 = jnp.zeros((B, H), jnp.float32)
    for t in range(T):
        h1, c1 = cell(x[:, t, :], h1, c1, wih1, whh1, b1)
        h2, c2 = cell(h1, h2, c2, wih2, whh2, b2)
    return h2 @ wfc + bfc


if __name__ == "__main__":
    key = jax.random.PRNGKey(0)
    k_x, k_p = jax.random.split(key)
    B, T = 2, 8
    x = jax.random.normal(k_x, (B, T, INPUT_DIM), jnp.float32)
    params = init_params(k_p)
    packed = pack_params(params)   # one-time repack, outside the forward

    out = lstm_model_forward(x, packed)
    out = jax.block_until_ready(out)

    ref = reference_forward(x, params)
    assert out.shape == (B, OUTPUT_DIM)
    assert jnp.allclose(out, ref, atol=5e-5, rtol=1e-5), (out, ref)
    print("KERNEL_OK")
</pallas_src>

<mosaic_0001>
module attributes {stable_mosaic.version = 11 : i64} {
  func.func @_lstm_kernel(%arg0: memref<64x4xf32, #tpu.memory_space<vmem>>, %arg1: memref<4x64xf32, #tpu.memory_space<vmem>>, %arg2: memref<16x64xf32, #tpu.memory_space<vmem>>, %arg3: memref<1x64xf32, #tpu.memory_space<vmem>>, %arg4: memref<16x64xf32, #tpu.memory_space<vmem>>, %arg5: memref<16x64xf32, #tpu.memory_space<vmem>>, %arg6: memref<1x64xf32, #tpu.memory_space<vmem>>, %arg7: memref<16x128xf32, #tpu.memory_space<vmem>>, %arg8: memref<1x128xf32, #tpu.memory_space<vmem>>, %arg9: memref<8x128xf32, #tpu.memory_space<vmem>>) attributes {dimension_semantics = [], scalar_prefetch = 0 : i64, scratch_operands = 0 : i64, tpu.core_type = #tpu.core_type<tc>} {
    %c0 = arith.constant 0 : index
    %c0_0 = arith.constant 0 : index
    %0 = vector.load %arg2[%c0, %c0_0] : memref<16x64xf32, #tpu.memory_space<vmem>>, vector<16x64xf32>
    %c0_1 = arith.constant 0 : index
    %c0_2 = arith.constant 0 : index
    %1 = vector.load %arg4[%c0_1, %c0_2] : memref<16x64xf32, #tpu.memory_space<vmem>>, vector<16x64xf32>
    %c0_3 = arith.constant 0 : index
    %c0_4 = arith.constant 0 : index
    %2 = vector.load %arg5[%c0_3, %c0_4] : memref<16x64xf32, #tpu.memory_space<vmem>>, vector<16x64xf32>
    %c0_5 = arith.constant 0 : index
    %c0_6 = arith.constant 0 : index
    %3 = vector.load %arg0[%c0_5, %c0_6] : memref<64x4xf32, #tpu.memory_space<vmem>>, vector<64x4xf32>
    %c0_7 = arith.constant 0 : index
    %c0_8 = arith.constant 0 : index
    %4 = vector.load %arg1[%c0_7, %c0_8] : memref<4x64xf32, #tpu.memory_space<vmem>>, vector<4x64xf32>
    %cst = arith.constant dense<0.000000e+00> : vector<64x64xf32>
    %5 = tpu.matmul %3, %4, %cst {dimension_numbers = #tpu.dot_dimension_numbers<[1], [0], [0], [1], [0, 0, 1, 1], [], []>} : vector<64x4xf32>, vector<4x64xf32>, vector<64x64xf32> -> vector<64x64xf32>
    %c0_9 = arith.constant 0 : index
    %c0_10 = arith.constant 0 : index
    %6 = vector.load %arg3[%c0_9, %c0_10] : memref<1x64xf32, #tpu.memory_space<vmem>>, vector<1x64xf32>
    %7 = vector.shape_cast %6 : vector<1x64xf32> to vector<1x64xf32>
    %8 = vector.broadcast %7 : vector<1x64xf32> to vector<64x64xf32>
    %9 = arith.addf %5, %8 : vector<64x64xf32>
    %c0_11 = arith.constant 0 : index
    %c0_12 = arith.constant 0 : index
    %10 = vector.load %arg6[%c0_11, %c0_12] : memref<1x64xf32, #tpu.memory_space<vmem>>, vector<1x64xf32>
    %11 = vector.shape_cast %10 : vector<1x64xf32> to vector<1x64xf32>
    %12 = vector.broadcast %11 : vector<1x64xf32> to vector<8x64xf32>
    %13 = tpu.iota {dimensions = array<i32: 1>} : vector<8x64xi32>
    %c32_i32 = arith.constant 32 : i32
    %14 = vector.broadcast %c32_i32 : i32 to vector<8x64xi32>
    %15 = arith.cmpi sge, %13, %14 : vector<8x64xi32>
    %c48_i32 = arith.constant 48 : i32
    %16 = vector.broadcast %c48_i32 : i32 to vector<8x64xi32>
    %17 = arith.cmpi slt, %13, %16 : vector<8x64xi32>
    %18 = arith.andi %15, %17 : vector<8x64xi1>
    %cst_13 = arith.constant 1.000000e+00 : f32
    %cst_14 = arith.constant 5.000000e-01 : f32
    %19 = vector.broadcast %cst_13 : f32 to vector<8x64xf32>
    %20 = vector.broadcast %cst_14 : f32 to vector<8x64xf32>
    %21 = arith.select %18, %19, %20 : vector<8x64xi1>, vector<8x64xf32>
    %cst_15 = arith.constant 0.000000e+00 : f32
    %cst_16 = arith.constant 5.000000e-01 : f32
    %22 = vector.broadcast %cst_15 : f32 to vector<8x64xf32>
    %23 = vector.broadcast %cst_16 : f32 to vector<8x64xf32>
    %24 = arith.select %18, %22, %23 : vector<8x64xi1>, vector<8x64xf32>
    %cst_17 = arith.constant 0.000000e+00 : f32
    %25 = vector.broadcast %cst_17 : f32 to vector<8x16xf32>
    %cst_18 = arith.constant 0.000000e+00 : f32
    %26 = vector.broadcast %cst_18 : f32 to vector<8x16xf32>
    %cst_19 = arith.constant 0.000000e+00 : f32
    %27 = vector.broadcast %cst_19 : f32 to vector<8x16xf32>
    %cst_20 = arith.constant 0.000000e+00 : f32
    %28 = vector.broadcast %cst_20 : f32 to vector<8x16xf32>
    %29 = vector.extract_strided_slice %9 {offsets = [0, 0], sizes = [8, 64], strides = [1, 1]} : vector<64x64xf32> to vector<8x64xf32>
    %cst_21 = arith.constant dense<0.000000e+00> : vector<8x64xf32>
    %30 = tpu.matmul %25, %0, %cst_21 {dimension_numbers = #tpu.dot_dimension_numbers<[1], [0], [0], [1], [0, 0, 1, 1], [], []>} : vector<8x16xf32>, vector<16x64xf32>, vector<8x64xf32> -> vector<8x64xf32>
    %31 = arith.addf %29, %30 : vector<8x64xf32>
    %32 = arith.mulf %31, %21 : vector<8x64xf32>
    %33 = math.tanh %32 : vector<8x64xf32>
    %34 = arith.mulf %21, %33 : vector<8x64xf32>
    %35 = arith.addf %34, %24 : vector<8x64xf32>
    %36 = vector.extract_strided_slice %35 {offsets = [0, 16], sizes = [8, 16], strides = [1, 1]} : vector<8x64xf32> to vector<8x16xf32>
    %37 = arith.mulf %36, %26 : vector<8x16xf32>
    %38 = vector.extract_strided_slice %35 {offsets = [0, 0], sizes = [8, 16], strides = [1, 1]} : vector<8x64xf32> to vector<8x16xf32>
    %39 = vector.extract_strided_slice %35 {offsets = [0, 32], sizes = [8, 16], strides = [1, 1]} : vector<8x64xf32> to vector<8x16xf32>
    %40 = arith.mulf %38, %39 : vector<8x16xf32>
    %41 = arith.addf %37, %40 : vector<8x16xf32>
    %42 = vector.extract_strided_slice %35 {offsets = [0, 48], sizes = [8, 16], strides = [1, 1]} : vector<8x64xf32> to vector<8x16xf32>
    %43 = math.tanh %41 : vector<8x16xf32>
    %44 = arith.mulf %42, %43 : vector<8x16xf32>
    %cst_22 = arith.constant dense<0.000000e+00> : vector<8x64xf32>
    %45 = tpu.matmul %44, %1, %cst_22 {dimension_numbers = #tpu.dot_dimension_numbers<[1], [0], [0], [1], [0, 0, 1, 1], [], []>} : vector<8x16xf32>, vector<16x64xf32>, vector<8x64xf32> -> vector<8x64xf32>
    %cst_23 = arith.constant dense<0.000000e+00> : vector<8x64xf32>
    %46 = tpu.matmul %27, %2, %cst_23 {dimension_numbers = #tpu.dot_dimension_numbers<[1], [0], [0], [1], [0, 0, 1, 1], [], []>} : vector<8x16xf32>, vector<16x64xf32>, vector<8x64xf32> -> vector<8x64xf32>
    %47 = arith.addf %45, %46 : vector<8x64xf32>
    %48 = arith.addf %47, %12 : vector<8x64xf32>
    %49 = arith.mulf %48, %21 : vector<8x64xf32>
    %50 = math.tanh %49 : vector<8x64xf32>
    %51 = arith.mulf %21, %50 : vector<8x64xf32>
    %52 = arith.addf %51, %24 : vector<8x64xf32>
    %53 = vector.extract_strided_slice %52 {offsets = [0, 16], sizes = [8, 16], strides = [1, 1]} : vector<8x64xf32> to vector<8x16xf32>
    %54 = arith.mulf %53, %28 : vector<8x16xf32>
    %55 = vector.extract_strided_slice %52 {offsets = [0, 0], sizes = [8, 16], strides = [1, 1]} : vector<8x64xf32> to vector<8x16xf32>
    %56 = vector.extract_strided_slice %52 {offsets = [0, 32], sizes = [8, 16], strides = [1, 1]} : vector<8x64xf32> to vector<8x16xf32>
    %57 = arith.mulf %55, %56 : vector<8x16xf32>
    %58 = arith.addf %54, %57 : vector<8x16xf32>
    %59 = vector.extract_strided_slice %52 {offsets = [0, 48], sizes = [8, 16], strides = [1, 1]} : vector<8x64xf32> to vector<8x16xf32>
    %60 = math.tanh %58 : vector<8x16xf32>
    %61 = arith.mulf %59, %60 : vector<8x16xf32>
    %62 = vector.extract_strided_slice %9 {offsets = [8, 0], sizes = [8, 64], strides = [1, 1]} : vector<64x64xf32> to vector<8x64xf32>
    %cst_24 = arith.constant dense<0.000000e+00> : vector<8x64xf32>
    %63 = tpu.matmul %44, %0, %cst_24 {dimension_numbers = #tpu.dot_dimension_numbers<[1], [0], [0], [1], [0, 0, 1, 1], [], []>} : vector<8x16xf32>, vector<16x64xf32>, vector<8x64xf32> -> vector<8x64xf32>
    %64 = arith.addf %62, %63 : vector<8x64xf32>
    %65 = arith.mulf %64, %21 : vector<8x64xf32>
    %66 = math.tanh %65 : vector<8x64xf32>
    %67 = arith.mulf %21, %66 : vector<8x64xf32>
    %68 = arith.addf %67, %24 : vector<8x64xf32>
    %69 = vector.extract_strided_slice %68 {offsets = [0, 16], sizes = [8, 16], strides = [1, 1]} : vector<8x64xf32> to vector<8x16xf32>
    %70 = arith.mulf %69, %41 : vector<8x16xf32>
    %71 = vector.extract_strided_slice %68 {offsets = [0, 0], sizes = [8, 16], strides = [1, 1]} : vector<8x64xf32> to vector<8x16xf32>
    %72 = vector.extract_strided_slice %68 {offsets = [0, 32], sizes = [8, 16], strides = [1, 1]} : vector<8x64xf32> to vector<8x16xf32>
    %73 = arith.mulf %71, %72 : vector<8x16xf32>
    %74 = arith.addf %70, %73 : vector<8x16xf32>
    %75 = vector.extract_strided_slice %68 {offsets = [0, 48], sizes = [8, 16], strides = [1, 1]} : vector<8x64xf32> to vector<8x16xf32>
    %76 = math.tanh %74 : vector<8x16xf32>
    %77 = arith.mulf %75, %76 : vector<8x16xf32>
    %cst_25 = arith.constant dense<0.000000e+00> : vector<8x64xf32>
    %78 = tpu.matmul %77, %1, %cst_25 {dimension_numbers = #tpu.dot_dimension_numbers<[1], [0], [0], [1], [0, 0, 1, 1], [], []>} : vector<8x16xf32>, vector<16x64xf32>, vector<8x64xf32> -> vector<8x64xf32>
    %cst_26 = arith.constant dense<0.000000e+00> : vector<8x64xf32>
    %79 = tpu.matmul %61, %2, %cst_26 {dimension_numbers = #tpu.dot_dimension_numbers<[1], [0], [0], [1], [0, 0, 1, 1], [], []>} : vector<8x16xf32>, vector<16x64xf32>, vector<8x64xf32> -> vector<8x64xf32>
    %80 = arith.addf %78, %79 : vector<8x64xf32>
    %81 = arith.addf %80, %12 : vector<8x64xf32>
    %82 = arith.mulf %81, %21 : vector<8x64xf32>
    %83 = math.tanh %82 : vector<8x64xf32>
    %84 = arith.mulf %21, %83 : vector<8x64xf32>
    %85 = arith.addf %84, %24 : vector<8x64xf32>
    %86 = vector.extract_strided_slice %85 {offsets = [0, 16], sizes = [8, 16], strides = [1, 1]} : vector<8x64xf32> to vector<8x16xf32>
    %87 = arith.mulf %86, %58 : vector<8x16xf32>
    %88 = vector.extract_strided_slice %85 {offsets = [0, 0], sizes = [8, 16], strides = [1, 1]} : vector<8x64xf32> to vector<8x16xf32>
    %89 = vector.extract_strided_slice %85 {offsets = [0, 32], sizes = [8, 16], strides = [1, 1]} : vector<8x64xf32> to vector<8x16xf32>
    %90 = arith.mulf %88, %89 : vector<8x16xf32>
    %91 = arith.addf %87, %90 : vector<8x16xf32>
    %92 = vector.extract_strided_slice %85 {offsets = [0, 48], sizes = [8, 16], strides = [1, 1]} : vector<8x64xf32> to vector<8x16xf32>
    %93 = math.tanh %91 : vector<8x16xf32>
    %94 = arith.mulf %92, %93 : vector<8x16xf32>
    %95 = vector.extract_strided_slice %9 {offsets = [16, 0], sizes = [8, 64], strides = [1, 1]} : vector<64x64xf32> to vector<8x64xf32>
    %cst_27 = arith.constant dense<0.000000e+00> : vector<8x64xf32>
    %96 = tpu.matmul %77, %0, %cst_27 {dimension_numbers = #tpu.dot_dimension_numbers<[1], [0], [0], [1], [0, 0, 1, 1], [], []>} : vector<8x16xf32>, vector<16x64xf32>, vector<8x64xf32> -> vector<8x64xf32>
    %97 = arith.addf %95, %96 : vector<8x64xf32>
    %98 = arith.mulf %97, %21 : vector<8x64xf32>
    %99 = math.tanh %98 : vector<8x64xf32>
    %100 = arith.mulf %21, %99 : vector<8x64xf32>
    %101 = arith.addf %100, %24 : vector<8x64xf32>
    %102 = vector.extract_strided_slice %101 {offsets = [0, 16], sizes = [8, 16], strides = [1, 1]} : vector<8x64xf32> to vector<8x16xf32>
    %103 = arith.mulf %102, %74 : vector<8x16xf32>
    %104 = vector.extract_strided_slice %101 {offsets = [0, 0], sizes = [8, 16], strides = [1, 1]} : vector<8x64xf32> to vector<8x16xf32>
    %105 = vector.extract_strided_slice %101 {offsets = [0, 32], sizes = [8, 16], strides = [1, 1]} : vector<8x64xf32> to vector<8x16xf32>
    %106 = arith.mulf %104, %105 : vector<8x16xf32>
    %107 = arith.addf %103, %106 : vector<8x16xf32>
    %108 = vector.extract_strided_slice %101 {offsets = [0, 48], sizes = [8, 16], strides = [1, 1]} : vector<8x64xf32> to vector<8x16xf32>
    %109 = math.tanh %107 : vector<8x16xf32>
    %110 = arith.mulf %108, %109 : vector<8x16xf32>
    %cst_28 = arith.constant dense<0.000000e+00> : vector<8x64xf32>
    %111 = tpu.matmul %110, %1, %cst_28 {dimension_numbers = #tpu.dot_dimension_numbers<[1], [0], [0], [1], [0, 0, 1, 1], [], []>} : vector<8x16xf32>, vector<16x64xf32>, vector<8x64xf32> -> vector<8x64xf32>
    %cst_29 = arith.constant dense<0.000000e+00> : vector<8x64xf32>
    %112 = tpu.matmul %94, %2, %cst_29 {dimension_numbers = #tpu.dot_dimension_numbers<[1], [0], [0], [1], [0, 0, 1, 1], [], []>} : vector<8x16xf32>, vector<16x64xf32>, vector<8x64xf32> -> vector<8x64xf32>
    %113 = arith.addf %111, %112 : vector<8x64xf32>
    %114 = arith.addf %113, %12 : vector<8x64xf32>
    %115 = arith.mulf %114, %21 : vector<8x64xf32>
    %116 = math.tanh %115 : vector<8x64xf32>
    %117 = arith.mulf %21, %116 : vector<8x64xf32>
    %118 = arith.addf %117, %24 : vector<8x64xf32>
    %119 = vector.extract_strided_slice %118 {offsets = [0, 16], sizes = [8, 16], strides = [1, 1]} : vector<8x64xf32> to vector<8x16xf32>
    %120 = arith.mulf %119, %91 : vector<8x16xf32>
    %121 = vector.extract_strided_slice %118 {offsets = [0, 0], sizes = [8, 16], strides = [1, 1]} : vector<8x64xf32> to vector<8x16xf32>
    %122 = vector.extract_strided_slice %118 {offsets = [0, 32], sizes = [8, 16], strides = [1, 1]} : vector<8x64xf32> to vector<8x16xf32>
    %123 = arith.mulf %121, %122 : vector<8x16xf32>
    %124 = arith.addf %120, %123 : vector<8x16xf32>
    %125 = vector.extract_strided_slice %118 {offsets = [0, 48], sizes = [8, 16], strides = [1, 1]} : vector<8x64xf32> to vector<8x16xf32>
    %126 = math.tanh %124 : vector<8x16xf32>
    %127 = arith.mulf %125, %126 : vector<8x16xf32>
    %128 = vector.extract_strided_slice %9 {offsets = [24, 0], sizes = [8, 64], strides = [1, 1]} : vector<64x64xf32> to vector<8x64xf32>
    %cst_30 = arith.constant dense<0.000000e+00> : vector<8x64xf32>
    %129 = tpu.matmul %110, %0, %cst_30 {dimension_numbers = #tpu.dot_dimension_numbers<[1], [0], [0], [1], [0, 0, 1, 1], [], []>} : vector<8x16xf32>, vector<16x64xf32>, vector<8x64xf32> -> vector<8x64xf32>
    %130 = arith.addf %128, %129 : vector<8x64xf32>
    %131 = arith.mulf %130, %21 : vector<8x64xf32>
    %132 = math.tanh %131 : vector<8x64xf32>
    %133 = arith.mulf %21, %132 : vector<8x64xf32>
    %134 = arith.addf %133, %24 : vector<8x64xf32>
    %135 = vector.extract_strided_slice %134 {offsets = [0, 16], sizes = [8, 16], strides = [1, 1]} : vector<8x64xf32> to vector<8x16xf32>
    %136 = arith.mulf %135, %107 : vector<8x16xf32>
    %137 = vector.extract_strided_slice %134 {offsets = [0, 0], sizes = [8, 16], strides = [1, 1]} : vector<8x64xf32> to vector<8x16xf32>
    %138 = vector.extract_strided_slice %134 {offsets = [0, 32], sizes = [8, 16], strides = [1, 1]} : vector<8x64xf32> to vector<8x16xf32>
    %139 = arith.mulf %137, %138 : vector<8x16xf32>
    %140 = arith.addf %136, %139 : vector<8x16xf32>
    %141 = vector.extract_strided_slice %134 {offsets = [0, 48], sizes = [8, 16], strides = [1, 1]} : vector<8x64xf32> to vector<8x16xf32>
    %142 = math.tanh %140 : vector<8x16xf32>
    %143 = arith.mulf %141, %142 : vector<8x16xf32>
    %cst_31 = arith.constant dense<0.000000e+00> : vector<8x64xf32>
    %144 = tpu.matmul %143, %1, %cst_31 {dimension_numbers = #tpu.dot_dimension_numbers<[1], [0], [0], [1], [0, 0, 1, 1], [], []>} : vector<8x16xf32>, vector<16x64xf32>, vector<8x64xf32> -> vector<8x64xf32>
    %cst_32 = arith.constant dense<0.000000e+00> : vector<8x64xf32>
    %145 = tpu.matmul %127, %2, %cst_32 {dimension_numbers = #tpu.dot_dimension_numbers<[1], [0], [0], [1], [0, 0, 1, 1], [], []>} : vector<8x16xf32>, vector<16x64xf32>, vector<8x64xf32> -> vector<8x64xf32>
    %146 = arith.addf %144, %145 : vector<8x64xf32>
    %147 = arith.addf %146, %12 : vector<8x64xf32>
    %148 = arith.mulf %147, %21 : vector<8x64xf32>
    %149 = math.tanh %148 : vector<8x64xf32>
    %150 = arith.mulf %21, %149 : vector<8x64xf32>
    %151 = arith.addf %150, %24 : vector<8x64xf32>
    %152 = vector.extract_strided_slice %151 {offsets = [0, 16], sizes = [8, 16], strides = [1, 1]} : vector<8x64xf32> to vector<8x16xf32>
    %153 = arith.mulf %152, %124 : vector<8x16xf32>
    %154 = vector.extract_strided_slice %151 {offsets = [0, 0], sizes = [8, 16], strides = [1, 1]} : vector<8x64xf32> to vector<8x16xf32>
    %155 = vector.extract_strided_slice %151 {offsets = [0, 32], sizes = [8, 16], strides = [1, 1]} : vector<8x64xf32> to vector<8x16xf32>
    %156 = arith.mulf %154, %155 : vector<8x16xf32>
    %157 = arith.addf %153, %156 : vector<8x16xf32>
    %158 = vector.extract_strided_slice %151 {offsets = [0, 48], sizes = [8, 16], strides = [1, 1]} : vector<8x64xf32> to vector<8x16xf32>
    %159 = math.tanh %157 : vector<8x16xf32>
    %160 = arith.mulf %158, %159 : vector<8x16xf32>
    %161 = vector.extract_strided_slice %9 {offsets = [32, 0], sizes = [8, 64], strides = [1, 1]} : vector<64x64xf32> to vector<8x64xf32>
    %cst_33 = arith.constant dense<0.000000e+00> : vector<8x64xf32>
    %162 = tpu.matmul %143, %0, %cst_33 {dimension_numbers = #tpu.dot_dimension_numbers<[1], [0], [0], [1], [0, 0, 1, 1], [], []>} : vector<8x16xf32>, vector<16x64xf32>, vector<8x64xf32> -> vector<8x64xf32>
    %163 = arith.addf %161, %162 : vector<8x64xf32>
    %164 = arith.mulf %163, %21 : vector<8x64xf32>
    %165 = math.tanh %164 : vector<8x64xf32>
    %166 = arith.mulf %21, %165 : vector<8x64xf32>
    %167 = arith.addf %166, %24 : vector<8x64xf32>
    %168 = vector.extract_strided_slice %167 {offsets = [0, 16], sizes = [8, 16], strides = [1, 1]} : vector<8x64xf32> to vector<8x16xf32>
    %169 = arith.mulf %168, %140 : vector<8x16xf32>
    %170 = vector.extract_strided_slice %167 {offsets = [0, 0], sizes = [8, 16], strides = [1, 1]} : vector<8x64xf32> to vector<8x16xf32>
    %171 = vector.extract_strided_slice %167 {offsets = [0, 32], sizes = [8, 16], strides = [1, 1]} : vector<8x64xf32> to vector<8x16xf32>
    %172 = arith.mulf %170, %171 : vector<8x16xf32>
    %173 = arith.addf %169, %172 : vector<8x16xf32>
    %174 = vector.extract_strided_slice %167 {offsets = [0, 48], sizes = [8, 16], strides = [1, 1]} : vector<8x64xf32> to vector<8x16xf32>
    %175 = math.tanh %173 : vector<8x16xf32>
    %176 = arith.mulf %174, %175 : vector<8x16xf32>
    %cst_34 = arith.constant dense<0.000000e+00> : vector<8x64xf32>
    %177 = tpu.matmul %176, %1, %cst_34 {dimension_numbers = #tpu.dot_dimension_numbers<[1], [0], [0], [1], [0, 0, 1, 1], [], []>} : vector<8x16xf32>, vector<16x64xf32>, vector<8x64xf32> -> vector<8x64xf32>
    %cst_35 = arith.constant dense<0.000000e+00> : vector<8x64xf32>
    %178 = tpu.matmul %160, %2, %cst_35 {dimension_numbers = #tpu.dot_dimension_numbers<[1], [0], [0], [1], [0, 0, 1, 1], [], []>} : vector<8x16xf32>, vector<16x64xf32>, vector<8x64xf32> -> vector<8x64xf32>
    %179 = arith.addf %177, %178 : vector<8x64xf32>
    %180 = arith.addf %179, %12 : vector<8x64xf32>
    %181 = arith.mulf %180, %21 : vector<8x64xf32>
    %182 = math.tanh %181 : vector<8x64xf32>
    %183 = arith.mulf %21, %182 : vector<8x64xf32>
    %184 = arith.addf %183, %24 : vector<8x64xf32>
    %185 = vector.extract_strided_slice %184 {offsets = [0, 16], sizes = [8, 16], strides = [1, 1]} : vector<8x64xf32> to vector<8x16xf32>
    %186 = arith.mulf %185, %157 : vector<8x16xf32>
    %187 = vector.extract_strided_slice %184 {offsets = [0, 0], sizes = [8, 16], strides = [1, 1]} : vector<8x64xf32> to vector<8x16xf32>
    %188 = vector.extract_strided_slice %184 {offsets = [0, 32], sizes = [8, 16], strides = [1, 1]} : vector<8x64xf32> to vector<8x16xf32>
    %189 = arith.mulf %187, %188 : vector<8x16xf32>
    %190 = arith.addf %186, %189 : vector<8x16xf32>
    %191 = vector.extract_strided_slice %184 {offsets = [0, 48], sizes = [8, 16], strides = [1, 1]} : vector<8x64xf32> to vector<8x16xf32>
    %192 = math.tanh %190 : vector<8x16xf32>
    %193 = arith.mulf %191, %192 : vector<8x16xf32>
    %194 = vector.extract_strided_slice %9 {offsets = [40, 0], sizes = [8, 64], strides = [1, 1]} : vector<64x64xf32> to vector<8x64xf32>
    %cst_36 = arith.constant dense<0.000000e+00> : vector<8x64xf32>
    %195 = tpu.matmul %176, %0, %cst_36 {dimension_numbers = #tpu.dot_dimension_numbers<[1], [0], [0], [1], [0, 0, 1, 1], [], []>} : vector<8x16xf32>, vector<16x64xf32>, vector<8x64xf32> -> vector<8x64xf32>
    %196 = arith.addf %194, %195 : vector<8x64xf32>
    %197 = arith.mulf %196, %21 : vector<8x64xf32>
    %198 = math.tanh %197 : vector<8x64xf32>
    %199 = arith.mulf %21, %198 : vector<8x64xf32>
    %200 = arith.addf %199, %24 : vector<8x64xf32>
    %201 = vector.extract_strided_slice %200 {offsets = [0, 16], sizes = [8, 16], strides = [1, 1]} : vector<8x64xf32> to vector<8x16xf32>
    %202 = arith.mulf %201, %173 : vector<8x16xf32>
    %203 = vector.extract_strided_slice %200 {offsets = [0, 0], sizes = [8, 16], strides = [1, 1]} : vector<8x64xf32> to vector<8x16xf32>
    %204 = vector.extract_strided_slice %200 {offsets = [0, 32], sizes = [8, 16], strides = [1, 1]} : vector<8x64xf32> to vector<8x16xf32>
    %205 = arith.mulf %203, %204 : vector<8x16xf32>
    %206 = arith.addf %202, %205 : vector<8x16xf32>
    %207 = vector.extract_strided_slice %200 {offsets = [0, 48], sizes = [8, 16], strides = [1, 1]} : vector<8x64xf32> to vector<8x16xf32>
    %208 = math.tanh %206 : vector<8x16xf32>
    %209 = arith.mulf %207, %208 : vector<8x16xf32>
    %cst_37 = arith.constant dense<0.000000e+00> : vector<8x64xf32>
    %210 = tpu.matmul %209, %1, %cst_37 {dimension_numbers = #tpu.dot_dimension_numbers<[1], [0], [0], [1], [0, 0, 1, 1], [], []>} : vector<8x16xf32>, vector<16x64xf32>, vector<8x64xf32> -> vector<8x64xf32>
    %cst_38 = arith.constant dense<0.000000e+00> : vector<8x64xf32>
    %211 = tpu.matmul %193, %2, %cst_38 {dimension_numbers = #tpu.dot_dimension_numbers<[1], [0], [0], [1], [0, 0, 1, 1], [], []>} : vector<8x16xf32>, vector<16x64xf32>, vector<8x64xf32> -> vector<8x64xf32>
    %212 = arith.addf %210, %211 : vector<8x64xf32>
    %213 = arith.addf %212, %12 : vector<8x64xf32>
    %214 = arith.mulf %213, %21 : vector<8x64xf32>
    %215 = math.tanh %214 : vector<8x64xf32>
    %216 = arith.mulf %21, %215 : vector<8x64xf32>
    %217 = arith.addf %216, %24 : vector<8x64xf32>
    %218 = vector.extract_strided_slice %217 {offsets = [0, 16], sizes = [8, 16], strides = [1, 1]} : vector<8x64xf32> to vector<8x16xf32>
    %219 = arith.mulf %218, %190 : vector<8x16xf32>
    %220 = vector.extract_strided_slice %217 {offsets = [0, 0], sizes = [8, 16], strides = [1, 1]} : vector<8x64xf32> to vector<8x16xf32>
    %221 = vector.extract_strided_slice %217 {offsets = [0, 32], sizes = [8, 16], strides = [1, 1]} : vector<8x64xf32> to vector<8x16xf32>
    %222 = arith.mulf %220, %221 : vector<8x16xf32>
    %223 = arith.addf %219, %222 : vector<8x16xf32>
    %224 = vector.extract_strided_slice %217 {offsets = [0, 48], sizes = [8, 16], strides = [1, 1]} : vector<8x64xf32> to vector<8x16xf32>
    %225 = math.tanh %223 : vector<8x16xf32>
    %226 = arith.mulf %224, %225 : vector<8x16xf32>
    %227 = vector.extract_strided_slice %9 {offsets = [48, 0], sizes = [8, 64], strides = [1, 1]} : vector<64x64xf32> to vector<8x64xf32>
    %cst_39 = arith.constant dense<0.000000e+00> : vector<8x64xf32>
    %228 = tpu.matmul %209, %0, %cst_39 {dimension_numbers = #tpu.dot_dimension_numbers<[1], [0], [0], [1], [0, 0, 1, 1], [], []>} : vector<8x16xf32>, vector<16x64xf32>, vector<8x64xf32> -> vector<8x64xf32>
    %229 = arith.addf %227, %228 : vector<8x64xf32>
    %230 = arith.mulf %229, %21 : vector<8x64xf32>
    %231 = math.tanh %230 : vector<8x64xf32>
    %232 = arith.mulf %21, %231 : vector<8x64xf32>
    %233 = arith.addf %232, %24 : vector<8x64xf32>
    %234 = vector.extract_strided_slice %233 {offsets = [0, 16], sizes = [8, 16], strides = [1, 1]} : vector<8x64xf32> to vector<8x16xf32>
    %235 = arith.mulf %234, %206 : vector<8x16xf32>
    %236 = vector.extract_strided_slice %233 {offsets = [0, 0], sizes = [8, 16], strides = [1, 1]} : vector<8x64xf32> to vector<8x16xf32>
    %237 = vector.extract_strided_slice %233 {offsets = [0, 32], sizes = [8, 16], strides = [1, 1]} : vector<8x64xf32> to vector<8x16xf32>
    %238 = arith.mulf %236, %237 : vector<8x16xf32>
    %239 = arith.addf %235, %238 : vector<8x16xf32>
    %240 = vector.extract_strided_slice %233 {offsets = [0, 48], sizes = [8, 16], strides = [1, 1]} : vector<8x64xf32> to vector<8x16xf32>
    %241 = math.tanh %239 : vector<8x16xf32>
    %242 = arith.mulf %240, %241 : vector<8x16xf32>
    %cst_40 = arith.constant dense<0.000000e+00> : vector<8x64xf32>
    %243 = tpu.matmul %242, %1, %cst_40 {dimension_numbers = #tpu.dot_dimension_numbers<[1], [0], [0], [1], [0, 0, 1, 1], [], []>} : vector<8x16xf32>, vector<16x64xf32>, vector<8x64xf32> -> vector<8x64xf32>
    %cst_41 = arith.constant dense<0.000000e+00> : vector<8x64xf32>
    %244 = tpu.matmul %226, %2, %cst_41 {dimension_numbers = #tpu.dot_dimension_numbers<[1], [0], [0], [1], [0, 0, 1, 1], [], []>} : vector<8x16xf32>, vector<16x64xf32>, vector<8x64xf32> -> vector<8x64xf32>
    %245 = arith.addf %243, %244 : vector<8x64xf32>
    %246 = arith.addf %245, %12 : vector<8x64xf32>
    %247 = arith.mulf %246, %21 : vector<8x64xf32>
    %248 = math.tanh %247 : vector<8x64xf32>
    %249 = arith.mulf %21, %248 : vector<8x64xf32>
    %250 = arith.addf %249, %24 : vector<8x64xf32>
    %251 = vector.extract_strided_slice %250 {offsets = [0, 16], sizes = [8, 16], strides = [1, 1]} : vector<8x64xf32> to vector<8x16xf32>
    %252 = arith.mulf %251, %223 : vector<8x16xf32>
    %253 = vector.extract_strided_slice %250 {offsets = [0, 0], sizes = [8, 16], strides = [1, 1]} : vector<8x64xf32> to vector<8x16xf32>
    %254 = vector.extract_strided_slice %250 {offsets = [0, 32], sizes = [8, 16], strides = [1, 1]} : vector<8x64xf32> to vector<8x16xf32>
    %255 = arith.mulf %253, %254 : vector<8x16xf32>
    %256 = arith.addf %252, %255 : vector<8x16xf32>
    %257 = vector.extract_strided_slice %250 {offsets = [0, 48], sizes = [8, 16], strides = [1, 1]} : vector<8x64xf32> to vector<8x16xf32>
    %258 = math.tanh %256 : vector<8x16xf32>
    %259 = arith.mulf %257, %258 : vector<8x16xf32>
    %260 = vector.extract_strided_slice %9 {offsets = [56, 0], sizes = [8, 64], strides = [1, 1]} : vector<64x64xf32> to vector<8x64xf32>
    %cst_42 = arith.constant dense<0.000000e+00> : vector<8x64xf32>
    %261 = tpu.matmul %242, %0, %cst_42 {dimension_numbers = #tpu.dot_dimension_numbers<[1], [0], [0], [1], [0, 0, 1, 1], [], []>} : vector<8x16xf32>, vector<16x64xf32>, vector<8x64xf32> -> vector<8x64xf32>
    %262 = arith.addf %260, %261 : vector<8x64xf32>
    %263 = arith.mulf %262, %21 : vector<8x64xf32>
    %264 = math.tanh %263 : vector<8x64xf32>
    %265 = arith.mulf %21, %264 : vector<8x64xf32>
    %266 = arith.addf %265, %24 : vector<8x64xf32>
    %267 = vector.extract_strided_slice %266 {offsets = [0, 16], sizes = [8, 16], strides = [1, 1]} : vector<8x64xf32> to vector<8x16xf32>
    %268 = arith.mulf %267, %239 : vector<8x16xf32>
    %269 = vector.extract_strided_slice %266 {offsets = [0, 0], sizes = [8, 16], strides = [1, 1]} : vector<8x64xf32> to vector<8x16xf32>
    %270 = vector.extract_strided_slice %266 {offsets = [0, 32], sizes = [8, 16], strides = [1, 1]} : vector<8x64xf32> to vector<8x16xf32>
    %271 = arith.mulf %269, %270 : vector<8x16xf32>
    %272 = arith.addf %268, %271 : vector<8x16xf32>
    %273 = vector.extract_strided_slice %266 {offsets = [0, 48], sizes = [8, 16], strides = [1, 1]} : vector<8x64xf32> to vector<8x16xf32>
    %274 = math.tanh %272 : vector<8x16xf32>
    %275 = arith.mulf %273, %274 : vector<8x16xf32>
    %cst_43 = arith.constant dense<0.000000e+00> : vector<8x64xf32>
    %276 = tpu.matmul %275, %1, %cst_43 {dimension_numbers = #tpu.dot_dimension_numbers<[1], [0], [0], [1], [0, 0, 1, 1], [], []>} : vector<8x16xf32>, vector<16x64xf32>, vector<8x64xf32> -> vector<8x64xf32>
    %cst_44 = arith.constant dense<0.000000e+00> : vector<8x64xf32>
    %277 = tpu.matmul %259, %2, %cst_44 {dimension_numbers = #tpu.dot_dimension_numbers<[1], [0], [0], [1], [0, 0, 1, 1], [], []>} : vector<8x16xf32>, vector<16x64xf32>, vector<8x64xf32> -> vector<8x64xf32>
    %278 = arith.addf %276, %277 : vector<8x64xf32>
    %279 = arith.addf %278, %12 : vector<8x64xf32>
    %280 = arith.mulf %279, %21 : vector<8x64xf32>
    %281 = math.tanh %280 : vector<8x64xf32>
    %282 = arith.mulf %21, %281 : vector<8x64xf32>
    %283 = arith.addf %282, %24 : vector<8x64xf32>
    %284 = vector.extract_strided_slice %283 {offsets = [0, 16], sizes = [8, 16], strides = [1, 1]} : vector<8x64xf32> to vector<8x16xf32>
    %285 = arith.mulf %284, %256 : vector<8x16xf32>
    %286 = vector.extract_strided_slice %283 {offsets = [0, 0], sizes = [8, 16], strides = [1, 1]} : vector<8x64xf32> to vector<8x16xf32>
    %287 = vector.extract_strided_slice %283 {offsets = [0, 32], sizes = [8, 16], strides = [1, 1]} : vector<8x64xf32> to vector<8x16xf32>
    %288 = arith.mulf %286, %287 : vector<8x16xf32>
    %289 = arith.addf %285, %288 : vector<8x16xf32>
    %290 = vector.extract_strided_slice %283 {offsets = [0, 48], sizes = [8, 16], strides = [1, 1]} : vector<8x64xf32> to vector<8x16xf32>
    %291 = math.tanh %289 : vector<8x16xf32>
    %292 = arith.mulf %290, %291 : vector<8x16xf32>
    %c0_45 = arith.constant 0 : index
    %c0_46 = arith.constant 0 : index
    %293 = vector.load %arg7[%c0_45, %c0_46] : memref<16x128xf32, #tpu.memory_space<vmem>>, vector<16x128xf32>
    %cst_47 = arith.constant dense<0.000000e+00> : vector<8x128xf32>
    %294 = tpu.matmul %292, %293, %cst_47 {dimension_numbers = #tpu.dot_dimension_numbers<[1], [0], [0], [1], [0, 0, 1, 1], [], []>} : vector<8x16xf32>, vector<16x128xf32>, vector<8x128xf32> -> vector<8x128xf32>
    %c0_48 = arith.constant 0 : index
    %c0_49 = arith.constant 0 : index
    %295 = vector.load %arg8[%c0_48, %c0_49] : memref<1x128xf32, #tpu.memory_space<vmem>>, vector<1x128xf32>
    %296 = vector.shape_cast %295 : vector<1x128xf32> to vector<1x128xf32>
    %297 = vector.broadcast %296 : vector<1x128xf32> to vector<8x128xf32>
    %298 = arith.addf %294, %297 : vector<8x128xf32>
    %c0_50 = arith.constant 0 : index
    %c0_51 = arith.constant 0 : index
    %299 = vector.load %arg9[%c0_50, %c0_51] : memref<8x128xf32, #tpu.memory_space<vmem>>, vector<8x128xf32>
    tpu.vector_store %arg9[%c0_50, %c0_51], %298 {strides = array<i32>} : memref<8x128xf32, #tpu.memory_space<vmem>>, vector<8x128xf32>,
    return
  }
}

</mosaic_0001>

<llo_original>
// kernel: lstm_model_forward.1
$region0: #{lstm_model_forward.1}
  #allocation0 [shape = 'u32[]', space=smem, size = 0x4, offset = 0x4, fixed_abs, tag = 'smem constant byte address 0x4 - core index']
  #allocation1 [shape = 'u32[144,128]{1,0:T(1,128)}', space=vmem, size = 0x12000, scoped, tag = 'internal scratch']
  %s0 = inlined_call_operand.vmem [shape: f32[64,4], index: 0, kind: input, shape index: {}]
  %s1 = inlined_call_operand.vmem [shape: f32[4,64], index: 1, kind: input, shape index: {}]
  %s2 = inlined_call_operand.vmem [shape: f32[16,64], index: 2, kind: input, shape index: {}]
  %s3 = inlined_call_operand.vmem [shape: f32[1,64], index: 3, kind: input, shape index: {}]
  %s4 = inlined_call_operand.vmem [shape: f32[16,64], index: 4, kind: input, shape index: {}]
  %s5 = inlined_call_operand.vmem [shape: f32[16,64], index: 5, kind: input, shape index: {}]
  %s6 = inlined_call_operand.vmem [shape: f32[1,64], index: 6, kind: input, shape index: {}]
  %s7 = inlined_call_operand.vmem [shape: f32[16,128], index: 7, kind: input, shape index: {}]
  %s8 = inlined_call_operand.vmem [shape: f32[1,128], index: 8, kind: input, shape index: {}]
  %s9 = inlined_call_operand.vmem [shape: f32[8,128], index: 9, kind: output, shape index: {}]
  %s10 = sld [smem:[#allocation0]]
  $region46: #{lstm_model_forward.1} parent=0
    _
  %s12 = ssub.s32 1, %s10
  %s13 = scalar_select 0, %s12, %s10
  // Predicated region
  $region2: #{lstm_model_forward.1} parent=0 // pred_check
    _
  $region3: #{lstm_model_forward.1} parent=0 // pred_check_branch
    %15 = sbr.rel (0) target = $region5
  $region4: #{lstm_model_forward.1} parent=0 // pred_region
    _
  $region5: #{lstm_model_forward.1} parent=0 // pred_fallthru
    _
  // Predicated region
  $region6: #{lstm_model_forward.1} parent=0 // pred_check
    _
  $region7: #{lstm_model_forward.1} parent=0 // pred_check_branch
    %17 = sbr.rel (0) target = $region9
  $region8: #{lstm_model_forward.1} parent=0 // pred_region
    _
  $region9: #{lstm_model_forward.1} parent=0 // pred_fallthru
    _
  // Predicated region
  $region10: #{lstm_model_forward.1} parent=0 // pred_check
    _
  $region11: #{lstm_model_forward.1} parent=0 // pred_check_branch
    %19 = sbr.rel (0) target = $region13
  $region12: #{lstm_model_forward.1} parent=0 // pred_region
    _
  $region13: #{lstm_model_forward.1} parent=0 // pred_fallthru
    _
  // Predicated region
  $region14: #{lstm_model_forward.1} parent=0 // pred_check
    _
  $region15: #{lstm_model_forward.1} parent=0 // pred_check_branch
    %21 = sbr.rel (0) target = $region17
  $region16: #{lstm_model_forward.1} parent=0 // pred_region
    _
  $region17: #{lstm_model_forward.1} parent=0 // pred_fallthru
    _
  // Predicated region
  $region18: #{lstm_model_forward.1} parent=0 // pred_check
    _
  $region19: #{lstm_model_forward.1} parent=0 // pred_check_branch
    %23 = sbr.rel (0) target = $region21
  $region20: #{lstm_model_forward.1} parent=0 // pred_region
    _
  $region21: #{lstm_model_forward.1} parent=0 // pred_fallthru
    _
  // Predicated region
  $region22: #{lstm_model_forward.1} parent=0 // pred_check
    _
  $region23: #{lstm_model_forward.1} parent=0 // pred_check_branch
    %25 = sbr.rel (0) target = $region25
  $region24: #{lstm_model_forward.1} parent=0 // pred_region
    _
  $region25: #{lstm_model_forward.1} parent=0 // pred_fallthru
    _
  // Predicated region
  $region26: #{lstm_model_forward.1} parent=0 // pred_check
    _
  $region27: #{lstm_model_forward.1} parent=0 // pred_check_branch
    %27 = sbr.rel (0) target = $region29
  $region28: #{lstm_model_forward.1} parent=0 // pred_region
    _
  $region29: #{lstm_model_forward.1} parent=0 // pred_fallthru
    _
  // Predicated region
  $region30: #{lstm_model_forward.1} parent=0 // pred_check
    _
  $region31: #{lstm_model_forward.1} parent=0 // pred_check_branch
    %29 = sbr.rel (0) target = $region33
  $region32: #{lstm_model_forward.1} parent=0 // pred_region
    _
  $region33: #{lstm_model_forward.1} parent=0 // pred_fallthru
    _
  // Predicated region
  $region34: #{lstm_model_forward.1} parent=0 // pred_check
    _
  $region35: #{lstm_model_forward.1} parent=0 // pred_check_branch
    %31 = sbr.rel (0) target = $region37
  $region36: #{lstm_model_forward.1} parent=0 // pred_region
    _
  $region37: #{lstm_model_forward.1} parent=0 // pred_fallthru
    _
  %v32 = vld [vmem:[%s2] sm:$0xff]
  %v33 = vld [vmem:[%s2 + $0x8] sm:$0xff]
  %v34 = vld [vmem:[%s4] sm:$0xff]
  %v35 = vld [vmem:[%s4 + $0x8] sm:$0xff]
  %v36 = vld [vmem:[%s5] sm:$0xff]
  %v37 = vld [vmem:[%s5 + $0x8] sm:$0xff]
  %v38 = vld [vmem:[%s0] sm:$0xff]
  %v39 = vld [vmem:[%s0 + $0x8] sm:$0xff]
  %v40 = vld [vmem:[%s0 + $0x10] sm:$0xff]
  %v41 = vld [vmem:[%s0 + $0x18] sm:$0xff]
  %v42 = vld [vmem:[%s0 + $0x20] sm:$0xff]
  %v43 = vld [vmem:[%s0 + $0x28] sm:$0xff]
  %v44 = vld [vmem:[%s0 + $0x30] sm:$0xff]
  %v45 = vld [vmem:[%s0 + $0x38] sm:$0xff]
  %v46 = vld [vmem:[%s1] sm:$0xf]
  %v47 = vld [vmem:[%s3] sm:$0x1]
  %v49 = vlaneseq
  %v50 = vshrl.u32 %v49, 7
  %v51 = vsub.s32 0, %v50
  %v52 = vrot.slane %v47, %v51
  %vm54 = vcmask 31744
  %v56 = vsel %vm54, %v38, 0
  %v59 = vsel %vm54, %v39, 0
  %v62 = vsel %vm54, %v40, 0
  %v65 = vsel %vm54, %v41, 0
  %v68 = vsel %vm54, %v42, 0
  %v71 = vsel %vm54, %v43, 0
  %v74 = vsel %vm54, %v44, 0
  %v77 = vsel %vm54, %v45, 0
  %vm79 = vcmask 1043456
  %v81 = vsel %vm79, %v46, 0
  %83 = vmatprep.subr.mxu0 0.0
  %84 = vmatpush1.msra.mxu0 %v81
  %85 = vmatprep.subr.mxu0 0.0
  %86 = vmatpush1.msra.mxu0 0.0
  %87 = vmatprep.subr.mxu0 0.0
  %88 = vmatpush1.msra.mxu0 0.0
  %89 = vmatprep.subr.mxu0 0.0
  %90 = vmatpush1.msra.mxu0 0.0
  %91 = vmatprep.subr.mxu0 0.0
  %92 = vmatpush1.msra.mxu0 0.0
  %93 = vmatprep.subr.mxu0 0.0
  %94 = vmatpush1.msra.mxu0 0.0
  %95 = vmatprep.subr.mxu0 0.0
  %96 = vmatpush1.msra.mxu0 0.0
  %97 = vmatprep.subr.mxu0 0.0
  %98 = vmatpush1.msra.mxu0 0.0
  %99 = vmatprep.subr.mxu0 0.0
  %100 = vmatpush1.msra.mxu0 0.0
  %101 = vmatprep.subr.mxu0 0.0
  %102 = vmatpush1.msra.mxu0 0.0
  %103 = vmatprep.subr.mxu0 0.0
  %104 = vmatpush1.msra.mxu0 0.0
  %105 = vmatprep.subr.mxu0 0.0
  %106 = vmatpush1.msra.mxu0 0.0
  %107 = vmatprep.subr.mxu0 0.0
  %108 = vmatpush1.msra.mxu0 0.0
  %109 = vmatprep.subr.mxu0 0.0
  %110 = vmatpush1.msra.mxu0 0.0
  %111 = vmatprep.subr.mxu0 0.0
  %112 = vmatpush1.msra.mxu0 0.0
  %113 = vmatprep.subr.mxu0 0.0
  %114 = vmatpush1.msra.mxu0 0.0
  %115 = vmatprep.subr.mxu0 0.0
  %116 = vmatpush1.msra.mxu0 0.0
  %117 = vmatprep.subr.mxu0 0.0
  %118 = vmatpush1.msra.mxu0 0.0
  %119 = vmatprep.subr.mxu0 0.0
  %120 = vmatpush1.msra.mxu0 0.0
  %121 = vmatprep.subr.mxu0 0.0
  %122 = vmatpush1.msra.mxu0 0.0
  %123 = vmatprep.subr.mxu0 0.0
  %124 = vmatpush1.msra.mxu0 0.0
  %125 = vmatprep.subr.mxu0 0.0
  %126 = vmatpush1.msra.mxu0 0.0
  %127 = vmatprep.subr.mxu0 0.0
  %128 = vmatpush1.msra.mxu0 0.0
  %129 = vmatprep.subr.mxu0 0.0
  %130 = vmatpush1.msra.mxu0 0.0
  %131 = vmatprep.subr.mxu0 0.0
  %132 = vmatpush1.msra.mxu0 0.0
  %133 = vmatprep.subr.mxu0 0.0
  %134 = vmatpush1.msra.mxu0 0.0
  %135 = vmatprep.subr.mxu0 0.0
  %136 = vmatpush1.msra.mxu0 0.0
  %137 = vmatprep.subr.mxu0 0.0
  %138 = vmatpush1.msra.mxu0 0.0
  %139 = vmatprep.subr.mxu0 0.0
  %140 = vmatpush1.msra.mxu0 0.0
  %141 = vmatprep.subr.mxu0 0.0
  %142 = vmatpush1.msra.mxu0 0.0
  %143 = vmatprep.subr.mxu0 0.0
  %144 = vmatpush1.msra.mxu0 0.0
  %145 = vmatprep.subr.mxu0 0.0
  %146 = vmatpush1.msra.mxu0 0.0
  %147 = vmatprep.mubr.f32.mxu0 0.0
  %148 = vmatmul.mubr.f32.gmra.mrb[0].mxu0 %v56
  %v149 = vpop.f32.mrb[0].mxu0
  %v150 = vadd.f32 %v52, %v149
  %v151 = vpop.f32.mrb[0].mxu0
  %152 = vmatprep.mubr.f32.mxu0 0.0
  %153 = vmatmul.mubr.f32.gmra.mrb[0].mxu0 %v59
  %v154 = vpop.f32.mrb[0].mxu0
  %v155 = vadd.f32 %v52, %v154
  %v156 = vpop.f32.mrb[0].mxu0
  %157 = vmatprep.mubr.f32.mxu0 0.0
  %158 = vmatmul.mubr.f32.gmra.mrb[0].mxu0 %v62
  %v159 = vpop.f32.mrb[0].mxu0
  %v160 = vadd.f32 %v52, %v159
  %v161 = vpop.f32.mrb[0].mxu0
  %162 = vmatprep.mubr.f32.mxu0 0.0
  %163 = vmatmul.mubr.f32.gmra.mrb[0].mxu0 %v65
  %v164 = vpop.f32.mrb[0].mxu0
  %v165 = vadd.f32 %v52, %v164
  %v166 = vpop.f32.mrb[0].mxu0
  %167 = vmatprep.mubr.f32.mxu0 0.0
  %168 = vmatmul.mubr.f32.gmra.mrb[0].mxu0 %v68
  %v169 = vpop.f32.mrb[0].mxu0
  %v170 = vadd.f32 %v52, %v169
  %v171 = vpop.f32.mrb[0].mxu0
  %172 = vmatprep.mubr.f32.mxu0 0.0
  %173 = vmatmul.mubr.f32.gmra.mrb[0].mxu0 %v71
  %v174 = vpop.f32.mrb[0].mxu0
  %v175 = vadd.f32 %v52, %v174
  %v176 = vpop.f32.mrb[0].mxu0
  %177 = vmatprep.mubr.f32.mxu0 0.0
  %178 = vmatmul.mubr.f32.gmra.mrb[0].mxu0 %v74
  %v179 = vpop.f32.mrb[0].mxu0
  %v180 = vadd.f32 %v52, %v179
  %v181 = vpop.f32.mrb[0].mxu0
  %182 = vmatprep.mubr.f32.mxu0 0.0
  %183 = vmatmul.mubr.f32.gmra.mrb[0].mxu0 %v77
  %v184 = vpop.f32.mrb[0].mxu0
  %v185 = vadd.f32 %v52, %v184
  %v186 = vpop.f32.mrb[0].mxu0
  %187 = vdwg.mxu0
  %v188 = vld [vmem:[%s6] sm:$0x1]
  %v190 = vlaneseq
  %v191 = vshrl.u32 %v190, 7
  %v192 = vsub.s32 0, %v191
  %v193 = vrot.slane %v188, %v192
  %v195 = vlaneseq
  %v196 = vand.u32 %v195, 127
  %vm197 = vcmp.ge.s32.totalorder %v196, 32
  %vm198 = vcmp.lt.s32.totalorder %v196, 48
  %vm199 = vmand %vm197, %vm198
  %v200 = vsel %vm199, 1.0, 0.5
  %v201 = vsel %vm199, 0.0, 0.5
  %vm202 = vcmask 130048
  %v204 = vsel %vm202, 0.0, 0
  %206 = vmatprep.subr.mxu0 0.0
  %207 = vmatpush1.msra.mxu0 %v32
  %208 = vmatprep.subr.mxu0 0.0
  %209 = vmatpush1.msra.mxu0 %v33
  %210 = vmatprep.subr.mxu0 0.0
  %211 = vmatpush1.msra.mxu0 0.0
  %212 = vmatprep.subr.mxu0 0.0
  %213 = vmatpush1.msra.mxu0 0.0
  %214 = vmatprep.subr.mxu0 0.0
  %215 = vmatpush1.msra.mxu0 0.0
  %216 = vmatprep.subr.mxu0 0.0
  %217 = vmatpush1.msra.mxu0 0.0
  %218 = vmatprep.subr.mxu0 0.0
  %219 = vmatpush1.msra.mxu0 0.0
  %220 = vmatprep.subr.mxu0 0.0
  %221 = vmatpush1.msra.mxu0 0.0
  %222 = vmatprep.subr.mxu0 0.0
  %223 = vmatpush1.msra.mxu0 0.0
  %224 = vmatprep.subr.mxu0 0.0
  %225 = vmatpush1.msra.mxu0 0.0
  %226 = vmatprep.subr.mxu0 0.0
  %227 = vmatpush1.msra.mxu0 0.0
  %228 = vmatprep.subr.mxu0 0.0
  %229 = vmatpush1.msra.mxu0 0.0
  %230 = vmatprep.subr.mxu0 0.0
  %231 = vmatpush1.msra.mxu0 0.0
  %232 = vmatprep.subr.mxu0 0.0
  %233 = vmatpush1.msra.mxu0 0.0
  %234 = vmatprep.subr.mxu0 0.0
  %235 = vmatpush1.msra.mxu0 0.0
  %236 = vmatprep.subr.mxu0 0.0
  %237 = vmatpush1.msra.mxu0 0.0
  %238 = vmatprep.subr.mxu0 0.0
  %239 = vmatpush1.msra.mxu0 0.0
  %240 = vmatprep.subr.mxu0 0.0
  %241 = vmatpush1.msra.mxu0 0.0
  %242 = vmatprep.subr.mxu0 0.0
  %243 = vmatpush1.msra.mxu0 0.0
  %244 = vmatprep.subr.mxu0 0.0
  %245 = vmatpush1.msra.mxu0 0.0
  %246 = vmatprep.subr.mxu0 0.0
  %247 = vmatpush1.msra.mxu0 0.0
  %248 = vmatprep.subr.mxu0 0.0
  %249 = vmatpush1.msra.mxu0 0.0
  %250 = vmatprep.subr.mxu0 0.0
  %251 = vmatpush1.msra.mxu0 0.0
  %252 = vmatprep.subr.mxu0 0.0
  %253 = vmatpush1.msra.mxu0 0.0
  %254 = vmatprep.subr.mxu0 0.0
  %255 = vmatpush1.msra.mxu0 0.0
  %256 = vmatprep.subr.mxu0 0.0
  %257 = vmatpush1.msra.mxu0 0.0
  %258 = vmatprep.subr.mxu0 0.0
  %259 = vmatpush1.msra.mxu0 0.0
  %260 = vmatprep.subr.mxu0 0.0
  %261 = vmatpush1.msra.mxu0 0.0
  %262 = vmatprep.subr.mxu0 0.0
  %263 = vmatpush1.msra.mxu0 0.0
  %264 = vmatprep.subr.mxu0 0.0
  %265 = vmatpush1.msra.mxu0 0.0
  %266 = vmatprep.subr.mxu0 0.0
  %267 = vmatpush1.msra.mxu0 0.0
  %268 = vmatprep.subr.mxu0 0.0
  %269 = vmatpush1.msra.mxu0 0.0
  %270 = vmatprep.mubr.f32.mxu0 0.0
  %271 = vmatmul.mubr.f32.gmra.mrb[0].mxu0 %v204
  %v272 = vpop.f32.mrb[0].mxu0
  %v273 = vadd.f32 0.0, %v272
  %v274 = vpop.f32.mrb[0].mxu0
  %275 = vdwg.mxu0
  %v276 = vadd.f32 %v150, %v273
  %v277 = vmul.f32 %v276, %v200
  %v278 = vtanh.pop %v277
  %v279 = vmul.f32 %v200, %v278
  %v280 = vadd.f32 %v279, %v201
  %v281 = vmul.f32 %v280, 0.0
  %283 = vrot.lane.b32.xlu0 %v280, 96
  %v284 = vpop.permute.xlu0 %283
  %v286 = vmul.f32 %v280, %v284
  %288 = vrot.lane.b32.xlu0 %v286, 16
  %v289 = vpop.permute.xlu0 %288
  %v291 = vadd.f32 %v281, %v289
  %v292 = vtanh.pop %v291
  %294 = vrot.lane.b32.xlu0 %v292, 32
  %v295 = vpop.permute.xlu0 %294
  %v297 = vmul.f32 %v280, %v295
  %298 = vmatprep.subr.mxu0 0.0
  %299 = vmatpush1.msra.mxu0 %v36
  %300 = vmatprep.subr.mxu0 0.0
  %301 = vmatpush1.msra.mxu0 %v37
  %302 = vmatprep.subr.mxu0 0.0
  %303 = vmatpush1.msra.mxu0 0.0
  %304 = vmatprep.subr.mxu0 0.0
  %305 = vmatpush1.msra.mxu0 0.0
  %306 = vmatprep.subr.mxu0 0.0
  %307 = vmatpush1.msra.mxu0 0.0
  %308 = vmatprep.subr.mxu0 0.0
  %309 = vmatpush1.msra.mxu0 0.0
  %310 = vmatprep.subr.mxu0 0.0
  %311 = vmatpush1.msra.mxu0 0.0
  %312 = vmatprep.subr.mxu0 0.0
  %313 = vmatpush1.msra.mxu0 0.0
  %314 = vmatprep.subr.mxu0 0.0
  %315 = vmatpush1.msra.mxu0 0.0
  %316 = vmatprep.subr.mxu0 0.0
  %317 = vmatpush1.msra.mxu0 0.0
  %318 = vmatprep.subr.mxu0 0.0
  %319 = vmatpush1.msra.mxu0 0.0
  %320 = vmatprep.subr.mxu0 0.0
  %321 = vmatpush1.msra.mxu0 0.0
  %322 = vmatprep.subr.mxu0 0.0
  %323 = vmatpush1.msra.mxu0 0.0
  %324 = vmatprep.subr.mxu0 0.0
  %325 = vmatpush1.msra.mxu0 0.0
  %326 = vmatprep.subr.mxu0 0.0
  %327 = vmatpush1.msra.mxu0 0.0
  %328 = vmatprep.subr.mxu0 0.0
  %329 = vmatpush1.msra.mxu0 0.0
  %330 = vmatprep.subr.mxu0 0.0
  %331 = vmatpush1.msra.mxu0 0.0
  %332 = vmatprep.subr.mxu0 0.0
  %333 = vmatpush1.msra.mxu0 0.0
  %334 = vmatprep.subr.mxu0 0.0
  %335 = vmatpush1.msra.mxu0 0.0
  %336 = vmatprep.subr.mxu0 0.0
  %337 = vmatpush1.msra.mxu0 0.0
  %338 = vmatprep.subr.mxu0 0.0
  %339 = vmatpush1.msra.mxu0 0.0
  %340 = vmatprep.subr.mxu0 0.0
  %341 = vmatpush1.msra.mxu0 0.0
  %342 = vmatprep.subr.mxu0 0.0
  %343 = vmatpush1.msra.mxu0 0.0
  %344 = vmatprep.subr.mxu0 0.0
  %345 = vmatpush1.msra.mxu0 0.0
  %346 = vmatprep.subr.mxu0 0.0
  %347 = vmatpush1.msra.mxu0 0.0
  %348 = vmatprep.subr.mxu0 0.0
  %349 = vmatpush1.msra.mxu0 0.0
  %350 = vmatprep.subr.mxu0 0.0
  %351 = vmatpush1.msra.mxu0 0.0
  %352 = vmatprep.subr.mxu0 0.0
  %353 = vmatpush1.msra.mxu0 0.0
  %354 = vmatprep.subr.mxu0 0.0
  %355 = vmatpush1.msra.mxu0 0.0
  %356 = vmatprep.subr.mxu0 0.0
  %357 = vmatpush1.msra.mxu0 0.0
  %358 = vmatprep.subr.mxu0 0.0
  %359 = vmatpush1.msra.mxu0 0.0
  %360 = vmatprep.subr.mxu0 0.0
  %361 = vmatpush1.msra.mxu0 0.0
  %362 = vmatprep.mubr.f32.mxu0 0.0
  %363 = vmatmul.mubr.f32.gmra.mrb[0].mxu0 %v204
  %v364 = vpop.f32.mrb[0].mxu0
  %v365 = vadd.f32 0.0, %v364
  %v366 = vpop.f32.mrb[0].mxu0
  %367 = vdwg.mxu0
  %369 = vrot.lane.b32.xlu0 %v297, 80
  %v370 = vpop.permute.xlu0 %369
  %v371 = vsel %vm202, %v370, 0
  %373 = vmatprep.subr.mxu0 0.0
  %374 = vmatpush1.msra.mxu0 %v34
  %375 = vmatprep.subr.mxu0 0.0
  %376 = vmatpush1.msra.mxu0 %v35
  %377 = vmatprep.subr.mxu0 0.0
  %378 = vmatpush1.msra.mxu0 0.0
  %379 = vmatprep.subr.mxu0 0.0
  %380 = vmatpush1.msra.mxu0 0.0
  %381 = vmatprep.subr.mxu0 0.0
  %382 = vmatpush1.msra.mxu0 0.0
  %383 = vmatprep.subr.mxu0 0.0
  %384 = vmatpush1.msra.mxu0 0.0
  %385 = vmatprep.subr.mxu0 0.0
  %386 = vmatpush1.msra.mxu0 0.0
  %387 = vmatprep.subr.mxu0 0.0
  %388 = vmatpush1.msra.mxu0 0.0
  %389 = vmatprep.subr.mxu0 0.0
  %390 = vmatpush1.msra.mxu0 0.0
  %391 = vmatprep.subr.mxu0 0.0
  %392 = vmatpush1.msra.mxu0 0.0
  %393 = vmatprep.subr.mxu0 0.0
  %394 = vmatpush1.msra.mxu0 0.0
  %395 = vmatprep.subr.mxu0 0.0
  %396 = vmatpush1.msra.mxu0 0.0
  %397 = vmatprep.subr.mxu0 0.0
  %398 = vmatpush1.msra.mxu0 0.0
  %399 = vmatprep.subr.mxu0 0.0
  %400 = vmatpush1.msra.mxu0 0.0
  %401 = vmatprep.subr.mxu0 0.0
  %402 = vmatpush1.msra.mxu0 0.0
  %403 = vmatprep.subr.mxu0 0.0
  %404 = vmatpush1.msra.mxu0 0.0
  %405 = vmatprep.subr.mxu0 0.0
  %406 = vmatpush1.msra.mxu0 0.0
  %407 = vmatprep.subr.mxu0 0.0
  %408 = vmatpush1.msra.mxu0 0.0
  %409 = vmatprep.subr.mxu0 0.0
  %410 = vmatpush1.msra.mxu0 0.0
  %411 = vmatprep.subr.mxu0 0.0
  %412 = vmatpush1.msra.mxu0 0.0
  %413 = vmatprep.subr.mxu0 0.0
  %414 = vmatpush1.msra.mxu0 0.0
  %415 = vmatprep.subr.mxu0 0.0
  %416 = vmatpush1.msra.mxu0 0.0
  %417 = vmatprep.subr.mxu0 0.0
  %418 = vmatpush1.msra.mxu0 0.0
  %419 = vmatprep.subr.mxu0 0.0
  %420 = vmatpush1.msra.mxu0 0.0
  %421 = vmatprep.subr.mxu0 0.0
  %422 = vmatpush1.msra.mxu0 0.0
  %423 = vmatprep.subr.mxu0 0.0
  %424 = vmatpush1.msra.mxu0 0.0
  %425 = vmatprep.subr.mxu0 0.0
  %426 = vmatpush1.msra.mxu0 0.0
  %427 = vmatprep.subr.mxu0 0.0
  %428 = vmatpush1.msra.mxu0 0.0
  %429 = vmatprep.subr.mxu0 0.0
  %430 = vmatpush1.msra.mxu0 0.0
  %431 = vmatprep.subr.mxu0 0.0
  %432 = vmatpush1.msra.mxu0 0.0
  %433 = vmatprep.subr.mxu0 0.0
  %434 = vmatpush1.msra.mxu0 0.0
  %435 = vmatprep.subr.mxu0 0.0
  %436 = vmatpush1.msra.mxu0 0.0
  %437 = vmatprep.mubr.f32.mxu0 0.0
  %438 = vmatmul.mubr.f32.gmra.mrb[0].mxu0 %v371
  %v439 = vpop.f32.mrb[0].mxu0
  %v440 = vadd.f32 %v365, %v439
  %v441 = vpop.f32.mrb[0].mxu0
  %442 = vdwg.mxu0
  %v443 = vadd.f32 %v440, %v193
  %v444 = vmul.f32 %v443, %v200
  %v445 = vtanh.pop %v444
  %v446 = vmul.f32 %v200, %v445
  %v447 = vadd.f32 %v446, %v201
  %v448 = vmul.f32 %v447, 0.0
  %450 = vrot.lane.b32.xlu0 %v447, 96
  %v451 = vpop.permute.xlu0 %450
  %v453 = vmul.f32 %v447, %v451
  %455 = vrot.lane.b32.xlu0 %v453, 16
  %v456 = vpop.permute.xlu0 %455
  %v458 = vadd.f32 %v448, %v456
  %v459 = vtanh.pop %v458
  %461 = vrot.lane.b32.xlu0 %v459, 32
  %v462 = vpop.permute.xlu0 %461
  %v464 = vmul.f32 %v447, %v462
  %465 = vmatprep.subr.mxu0 0.0
  %466 = vmatpush1.msra.mxu0 %v32
  %467 = vmatprep.subr.mxu0 0.0
  %468 = vmatpush1.msra.mxu0 %v33
  %469 = vmatprep.subr.mxu0 0.0
  %470 = vmatpush1.msra.mxu0 0.0
  %471 = vmatprep.subr.mxu0 0.0
  %472 = vmatpush1.msra.mxu0 0.0
  %473 = vmatprep.subr.mxu0 0.0
  %474 = vmatpush1.msra.mxu0 0.0
  %475 = vmatprep.subr.mxu0 0.0
  %476 = vmatpush1.msra.mxu0 0.0
  %477 = vmatprep.subr.mxu0 0.0
  %478 = vmatpush1.msra.mxu0 0.0
  %479 = vmatprep.subr.mxu0 0.0
  %480 = vmatpush1.msra.mxu0 0.0
  %481 = vmatprep.subr.mxu0 0.0
  %482 = vmatpush1.msra.mxu0 0.0
  %483 = vmatprep.subr.mxu0 0.0
  %484 = vmatpush1.msra.mxu0 0.0
  %485 = vmatprep.subr.mxu0 0.0
  %486 = vmatpush1.msra.mxu0 0.0
  %487 = vmatprep.subr.mxu0 0.0
  %488 = vmatpush1.msra.mxu0 0.0
  %489 = vmatprep.subr.mxu0 0.0
  %490 = vmatpush1.msra.mxu0 0.0
  %491 = vmatprep.subr.mxu0 0.0
  %492 = vmatpush1.msra.mxu0 0.0
  %493 = vmatprep.subr.mxu0 0.0
  %494 = vmatpush1.msra.mxu0 0.0
  %495 = vmatprep.subr.mxu0 0.0
  %496 = vmatpush1.msra.mxu0 0.0
  %497 = vmatprep.subr.mxu0 0.0
  %498 = vmatpush1.msra.mxu0 0.0
  %499 = vmatprep.subr.mxu0 0.0
  %500 = vmatpush1.msra.mxu0 0.0
  %501 = vmatprep.subr.mxu0 0.0
  %502 = vmatpush1.msra.mxu0 0.0
  %503 = vmatprep.subr.mxu0 0.0
  %504 = vmatpush1.msra.mxu0 0.0
  %505 = vmatprep.subr.mxu0 0.0
  %506 = vmatpush1.msra.mxu0 0.0
  %507 = vmatprep.subr.mxu0 0.0
  %508 = vmatpush1.msra.mxu0 0.0
  %509 = vmatprep.subr.mxu0 0.0
  %510 = vmatpush1.msra.mxu0 0.0
  %511 = vmatprep.subr.mxu0 0.0
  %512 = vmatpush1.msra.mxu0 0.0
  %513 = vmatprep.subr.mxu0 0.0
  %514 = vmatpush1.msra.mxu0 0.0
  %515 = vmatprep.subr.mxu0 0.0
  %516 = vmatpush1.msra.mxu0 0.0
  %517 = vmatprep.subr.mxu0 0.0
  %518 = vmatpush1.msra.mxu0 0.0
  %519 = vmatprep.subr.mxu0 0.0
  %520 = vmatpush1.msra.mxu0 0.0
  %521 = vmatprep.subr.mxu0 0.0
  %522 = vmatpush1.msra.mxu0 0.0
  %523 = vmatprep.subr.mxu0 0.0
  %524 = vmatpush1.msra.mxu0 0.0
  %525 = vmatprep.subr.mxu0 0.0
  %526 = vmatpush1.msra.mxu0 0.0
  %527 = vmatprep.subr.mxu0 0.0
  %528 = vmatpush1.msra.mxu0 0.0
  %529 = vmatprep.mubr.f32.mxu0 0.0
  %530 = vmatmul.mubr.f32.gmra.mrb[0].mxu0 %v371
  %v531 = vpop.f32.mrb[0].mxu0
  %v532 = vadd.f32 0.0, %v531
  %v533 = vpop.f32.mrb[0].mxu0
  %534 = vdwg.mxu0
  %v535 = vadd.f32 %v155, %v532
  %v536 = vmul.f32 %v535, %v200
  %v537 = vtanh.pop %v536
  %v538 = vmul.f32 %v200, %v537
  %v539 = vadd.f32 %v538, %v201
  %v540 = vmul.f32 %v539, %v291
  %542 = vrot.lane.b32.xlu0 %v539, 96
  %v543 = vpop.permute.xlu0 %542
  %v545 = vmul.f32 %v539, %v543
  %547 = vrot.lane.b32.xlu0 %v545, 16
  %v548 = vpop.permute.xlu0 %547
  %v550 = vadd.f32 %v540, %v548
  %v551 = vtanh.pop %v550
  %553 = vrot.lane.b32.xlu0 %v551, 32
  %v554 = vpop.permute.xlu0 %553
  %v556 = vmul.f32 %v539, %v554
  %558 = vrot.lane.b32.xlu0 %v464, 80
  %v559 = vpop.permute.xlu0 %558
  %v560 = vsel %vm202, %v559, 0
  %562 = vmatprep.subr.mxu0 0.0
  %563 = vmatpush1.msra.mxu0 %v36
  %564 = vmatprep.subr.mxu0 0.0
  %565 = vmatpush1.msra.mxu0 %v37
  %566 = vmatprep.subr.mxu0 0.0
  %567 = vmatpush1.msra.mxu0 0.0
  %568 = vmatprep.subr.mxu0 0.0
  %569 = vmatpush1.msra.mxu0 0.0
  %570 = vmatprep.subr.mxu0 0.0
  %571 = vmatpush1.msra.mxu0 0.0
  %572 = vmatprep.subr.mxu0 0.0
  %573 = vmatpush1.msra.mxu0 0.0
  %574 = vmatprep.subr.mxu0 0.0
  %575 = vmatpush1.msra.mxu0 0.0
  %576 = vmatprep.subr.mxu0 0.0
  %577 = vmatpush1.msra.mxu0 0.0
  %578 = vmatprep.subr.mxu0 0.0
  %579 = vmatpush1.msra.mxu0 0.0
  %580 = vmatprep.subr.mxu0 0.0
  %581 = vmatpush1.msra.mxu0 0.0
  %582 = vmatprep.subr.mxu0 0.0
  %583 = vmatpush1.msra.mxu0 0.0
  %584 = vmatprep.subr.mxu0 0.0
  %585 = vmatpush1.msra.mxu0 0.0
  %586 = vmatprep.subr.mxu0 0.0
  %587 = vmatpush1.msra.mxu0 0.0
  %588 = vmatprep.subr.mxu0 0.0
  %589 = vmatpush1.msra.mxu0 0.0
  %590 = vmatprep.subr.mxu0 0.0
  %591 = vmatpush1.msra.mxu0 0.0
  %592 = vmatprep.subr.mxu0 0.0
  %593 = vmatpush1.msra.mxu0 0.0
  %594 = vmatprep.subr.mxu0 0.0
  %595 = vmatpush1.msra.mxu0 0.0
  %596 = vmatprep.subr.mxu0 0.0
  %597 = vmatpush1.msra.mxu0 0.0
  %598 = vmatprep.subr.mxu0 0.0
  %599 = vmatpush1.msra.mxu0 0.0
  %600 = vmatprep.subr.mxu0 0.0
  %601 = vmatpush1.msra.mxu0 0.0
  %602 = vmatprep.subr.mxu0 0.0
  %603 = vmatpush1.msra.mxu0 0.0
  %604 = vmatprep.subr.mxu0 0.0
  %605 = vmatpush1.msra.mxu0 0.0
  %606 = vmatprep.subr.mxu0 0.0
  %607 = vmatpush1.msra.mxu0 0.0
  %608 = vmatprep.subr.mxu0 0.0
  %609 = vmatpush1.msra.mxu0 0.0
  %610 = vmatprep.subr.mxu0 0.0
  %611 = vmatpush1.msra.mxu0 0.0
  %612 = vmatprep.subr.mxu0 0.0
  %613 = vmatpush1.msra.mxu0 0.0
  %614 = vmatprep.subr.mxu0 0.0
  %615 = vmatpush1.msra.mxu0 0.0
  %616 = vmatprep.subr.mxu0 0.0
  %617 = vmatpush1.msra.mxu0 0.0
  %618 = vmatprep.subr.mxu0 0.0
  %619 = vmatpush1.msra.mxu0 0.0
  %620 = vmatprep.subr.mxu0 0.0
  %621 = vmatpush1.msra.mxu0 0.0
  %622 = vmatprep.subr.mxu0 0.0
  %623 = vmatpush1.msra.mxu0 0.0
  %624 = vmatprep.subr.mxu0 0.0
  %625 = vmatpush1.msra.mxu0 0.0
  %626 = vmatprep.mubr.f32.mxu0 0.0
  %627 = vmatmul.mubr.f32.gmra.mrb[0].mxu0 %v560
  %v628 = vpop.f32.mrb[0].mxu0
  %v629 = vadd.f32 0.0, %v628
  %v630 = vpop.f32.mrb[0].mxu0
  %631 = vdwg.mxu0
  %633 = vrot.lane.b32.xlu0 %v556, 80
  %v634 = vpop.permute.xlu0 %633
  %v635 = vsel %vm202, %v634, 0
  %637 = vmatprep.subr.mxu0 0.0
  %638 = vmatpush1.msra.mxu0 %v34
  %639 = vmatprep.subr.mxu0 0.0
  %640 = vmatpush1.msra.mxu0 %v35
  %641 = vmatprep.subr.mxu0 0.0
  %642 = vmatpush1.msra.mxu0 0.0
  %643 = vmatprep.subr.mxu0 0.0
  %644 = vmatpush1.msra.mxu0 0.0
  %645 = vmatprep.subr.mxu0 0.0
  %646 = vmatpush1.msra.mxu0 0.0
  %647 = vmatprep.subr.mxu0 0.0
  %648 = vmatpush1.msra.mxu0 0.0
  %649 = vmatprep.subr.mxu0 0.0
  %650 = vmatpush1.msra.mxu0 0.0
  %651 = vmatprep.subr.mxu0 0.0
  %652 = vmatpush1.msra.mxu0 0.0
  %653 = vmatprep.subr.mxu0 0.0
  %654 = vmatpush1.msra.mxu0 0.0
  %655 = vmatprep.subr.mxu0 0.0
  %656 = vmatpush1.msra.mxu0 0.0
  %657 = vmatprep.subr.mxu0 0.0
  %658 = vmatpush1.msra.mxu0 0.0
  %659 = vmatprep.subr.mxu0 0.0
  %660 = vmatpush1.msra.mxu0 0.0
  %661 = vmatprep.subr.mxu0 0.0
  %662 = vmatpush1.msra.mxu0 0.0
  %663 = vmatprep.subr.mxu0 0.0
  %664 = vmatpush1.msra.mxu0 0.0
  %665 = vmatprep.subr.mxu0 0.0
  %666 = vmatpush1.msra.mxu0 0.0
  %667 = vmatprep.subr.mxu0 0.0
  %668 = vmatpush1.msra.mxu0 0.0
  %669 = vmatprep.subr.mxu0 0.0
  %670 = vmatpush1.msra.mxu0 0.0
  %671 = vmatprep.subr.mxu0 0.0
  %672 = vmatpush1.msra.mxu0 0.0
  %673 = vmatprep.subr.mxu0 0.0
  %674 = vmatpush1.msra.mxu0 0.0
  %675 = vmatprep.subr.mxu0 0.0
  %676 = vmatpush1.msra.mxu0 0.0
  %677 = vmatprep.subr.mxu0 0.0
  %678 = vmatpush1.msra.mxu0 0.0
  %679 = vmatprep.subr.mxu0 0.0
  %680 = vmatpush1.msra.mxu0 0.0
  %681 = vmatprep.subr.mxu0 0.0
  %682 = vmatpush1.msra.mxu0 0.0
  %683 = vmatprep.subr.mxu0 0.0
  %684 = vmatpush1.msra.mxu0 0.0
  %685 = vmatprep.subr.mxu0 0.0
  %686 = vmatpush1.msra.mxu0 0.0
  %687 = vmatprep.subr.mxu0 0.0
  %688 = vmatpush1.msra.mxu0 0.0
  %689 = vmatprep.subr.mxu0 0.0
  %690 = vmatpush1.msra.mxu0 0.0
  %691 = vmatprep.subr.mxu0 0.0
  %692 = vmatpush1.msra.mxu0 0.0
  %693 = vmatprep.subr.mxu0 0.0
  %694 = vmatpush1.msra.mxu0 0.0
  %695 = vmatprep.subr.mxu0 0.0
  %696 = vmatpush1.msra.mxu0 0.0
  %697 = vmatprep.subr.mxu0 0.0
  %698 = vmatpush1.msra.mxu0 0.0
  %699 = vmatprep.subr.mxu0 0.0
  %700 = vmatpush1.msra.mxu0 0.0
  %701 = vmatprep.mubr.f32.mxu0 0.0
  %702 = vmatmul.mubr.f32.gmra.mrb[0].mxu0 %v635
  %v703 = vpop.f32.mrb[0].mxu0
  %v704 = vadd.f32 %v629, %v703
  %v705 = vpop.f32.mrb[0].mxu0
  %706 = vdwg.mxu0
  %v707 = vadd.f32 %v704, %v193
  %v708 = vmul.f32 %v707, %v200
  %v709 = vtanh.pop %v708
  %v710 = vmul.f32 %v200, %v709
  %v711 = vadd.f32 %v710, %v201
  %v712 = vmul.f32 %v711, %v458
  %714 = vrot.lane.b32.xlu0 %v711, 96
  %v715 = vpop.permute.xlu0 %714
  %v717 = vmul.f32 %v711, %v715
  %719 = vrot.lane.b32.xlu0 %v717, 16
  %v720 = vpop.permute.xlu0 %719
  %v722 = vadd.f32 %v712, %v720
  %v723 = vtanh.pop %v722
  %725 = vrot.lane.b32.xlu0 %v723, 32
  %v726 = vpop.permute.xlu0 %725
  %v728 = vmul.f32 %v711, %v726
  %729 = vmatprep.subr.mxu0 0.0
  %730 = vmatpush1.msra.mxu0 %v32
  %731 = vmatprep.subr.mxu0 0.0
  %732 = vmatpush1.msra.mxu0 %v33
  %733 = vmatprep.subr.mxu0 0.0
  %734 = vmatpush1.msra.mxu0 0.0
  %735 = vmatprep.subr.mxu0 0.0
  %736 = vmatpush1.msra.mxu0 0.0
  %737 = vmatprep.subr.mxu0 0.0
  %738 = vmatpush1.msra.mxu0 0.0
  %739 = vmatprep.subr.mxu0 0.0
  %740 = vmatpush1.msra.mxu0 0.0
  %741 = vmatprep.subr.mxu0 0.0
  %742 = vmatpush1.msra.mxu0 0.0
  %743 = vmatprep.subr.mxu0 0.0
  %744 = vmatpush1.msra.mxu0 0.0
  %745 = vmatprep.subr.mxu0 0.0
  %746 = vmatpush1.msra.mxu0 0.0
  %747 = vmatprep.subr.mxu0 0.0
  %748 = vmatpush1.msra.mxu0 0.0
  %749 = vmatprep.subr.mxu0 0.0
  %750 = vmatpush1.msra.mxu0 0.0
  %751 = vmatprep.subr.mxu0 0.0
  %752 = vmatpush1.msra.mxu0 0.0
  %753 = vmatprep.subr.mxu0 0.0
  %754 = vmatpush1.msra.mxu0 0.0
  %755 = vmatprep.subr.mxu0 0.0
  %756 = vmatpush1.msra.mxu0 0.0
  %757 = vmatprep.subr.mxu0 0.0
  %758 = vmatpush1.msra.mxu0 0.0
  %759 = vmatprep.subr.mxu0 0.0
  %760 = vmatpush1.msra.mxu0 0.0
  %761 = vmatprep.subr.mxu0 0.0
  %762 = vmatpush1.msra.mxu0 0.0
  %763 = vmatprep.subr.mxu0 0.0
  %764 = vmatpush1.msra.mxu0 0.0
  %765 = vmatprep.subr.mxu0 0.0
  %766 = vmatpush1.msra.mxu0 0.0
  %767 = vmatprep.subr.mxu0 0.0
  %768 = vmatpush1.msra.mxu0 0.0
  %769 = vmatprep.subr.mxu0 0.0
  %770 = vmatpush1.msra.mxu0 0.0
  %771 = vmatprep.subr.mxu0 0.0
  %772 = vmatpush1.msra.mxu0 0.0
  %773 = vmatprep.subr.mxu0 0.0
  %774 = vmatpush1.msra.mxu0 0.0
  %775 = vmatprep.subr.mxu0 0.0
  %776 = vmatpush1.msra.mxu0 0.0
  %777 = vmatprep.subr.mxu0 0.0
  %778 = vmatpush1.msra.mxu0 0.0
  %779 = vmatprep.subr.mxu0 0.0
  %780 = vmatpush1.msra.mxu0 0.0
  %781 = vmatprep.subr.mxu0 0.0
  %782 = vmatpush1.msra.mxu0 0.0
  %783 = vmatprep.subr.mxu0 0.0
  %784 = vmatpush1.msra.mxu0 0.0
  %785 = vmatprep.subr.mxu0 0.0
  %786 = vmatpush1.msra.mxu0 0.0
  %787 = vmatprep.subr.mxu0 0.0
  %788 = vmatpush1.msra.mxu0 0.0
  %789 = vmatprep.subr.mxu0 0.0
  %790 = vmatpush1.msra.mxu0 0.0
  %791 = vmatprep.subr.mxu0 0.0
  %792 = vmatpush1.msra.mxu0 0.0
  %793 = vmatprep.mubr.f32.mxu0 0.0
  %794 = vmatmul.mubr.f32.gmra.mrb[0].mxu0 %v635
  %v795 = vpop.f32.mrb[0].mxu0
  %v796 = vadd.f32 0.0, %v795
  %v797 = vpop.f32.mrb[0].mxu0
  %798 = vdwg.mxu0
  %v799 = vadd.f32 %v160, %v796
  %v800 = vmul.f32 %v799, %v200
  %v801 = vtanh.pop %v800
  %v802 = vmul.f32 %v200, %v801
  %v803 = vadd.f32 %v802, %v201
  %v804 = vmul.f32 %v803, %v550
  %806 = vrot.lane.b32.xlu0 %v803, 96
  %v807 = vpop.permute.xlu0 %806
  %v809 = vmul.f32 %v803, %v807
  %811 = vrot.lane.b32.xlu0 %v809, 16
  %v812 = vpop.permute.xlu0 %811
  %v814 = vadd.f32 %v804, %v812
  %v815 = vtanh.pop %v814
  %817 = vrot.lane.b32.xlu0 %v815, 32
  %v818 = vpop.permute.xlu0 %817
  %v820 = vmul.f32 %v803, %v818
  %822 = vrot.lane.b32.xlu0 %v728, 80
  %v823 = vpop.permute.xlu0 %822
  %v824 = vsel %vm202, %v823, 0
  %826 = vmatprep.subr.mxu0 0.0
  %827 = vmatpush1.msra.mxu0 %v36
  %828 = vmatprep.subr.mxu0 0.0
  %829 = vmatpush1.msra.mxu0 %v37
  %830 = vmatprep.subr.mxu0 0.0
  %831 = vmatpush1.msra.mxu0 0.0
  %832 = vmatprep.subr.mxu0 0.0
  %833 = vmatpush1.msra.mxu0 0.0
  %834 = vmatprep.subr.mxu0 0.0
  %835 = vmatpush1.msra.mxu0 0.0
  %836 = vmatprep.subr.mxu0 0.0
  %837 = vmatpush1.msra.mxu0 0.0
  %838 = vmatprep.subr.mxu0 0.0
  %839 = vmatpush1.msra.mxu0 0.0
  %840 = vmatprep.subr.mxu0 0.0
  %841 = vmatpush1.msra.mxu0 0.0
  %842 = vmatprep.subr.mxu0 0.0
  %843 = vmatpush1.msra.mxu0 0.0
  %844 = vmatprep.subr.mxu0 0.0
  %845 = vmatpush1.msra.mxu0 0.0
  %846 = vmatprep.subr.mxu0 0.0
  %847 = vmatpush1.msra.mxu0 0.0
  %848 = vmatprep.subr.mxu0 0.0
  %849 = vmatpush1.msra.mxu0 0.0
  %850 = vmatprep.subr.mxu0 0.0
  %851 = vmatpush1.msra.mxu0 0.0
  %852 = vmatprep.subr.mxu0 0.0
  %853 = vmatpush1.msra.mxu0 0.0
  %854 = vmatprep.subr.mxu0 0.0
  %855 = vmatpush1.msra.mxu0 0.0
  %856 = vmatprep.subr.mxu0 0.0
  %857 = vmatpush1.msra.mxu0 0.0
  %858 = vmatprep.subr.mxu0 0.0
  %859 = vmatpush1.msra.mxu0 0.0
  %860 = vmatprep.subr.mxu0 0.0
  %861 = vmatpush1.msra.mxu0 0.0
  %862 = vmatprep.subr.mxu0 0.0
  %863 = vmatpush1.msra.mxu0 0.0
  %864 = vmatprep.subr.mxu0 0.0
  %865 = vmatpush1.msra.mxu0 0.0
  %866 = vmatprep.subr.mxu0 0.0
  %867 = vmatpush1.msra.mxu0 0.0
  %868 = vmatprep.subr.mxu0 0.0
  %869 = vmatpush1.msra.mxu0 0.0
  %870 = vmatprep.subr.mxu0 0.0
  %871 = vmatpush1.msra.mxu0 0.0
  %872 = vmatprep.subr.mxu0 0.0
  %873 = vmatpush1.msra.mxu0 0.0
  %874 = vmatprep.subr.mxu0 0.0
  %875 = vmatpush1.msra.mxu0 0.0
  %876 = vmatprep.subr.mxu0 0.0
  %877 = vmatpush1.msra.mxu0 0.0
  %878 = vmatprep.subr.mxu0 0.0
  %879 = vmatpush1.msra.mxu0 0.0
  %880 = vmatprep.subr.mxu0 0.0
  %881 = vmatpush1.msra.mxu0 0.0
  %882 = vmatprep.subr.mxu0 0.0
  %883 = vmatpush1.msra.mxu0 0.0
  %884 = vmatprep.subr.mxu0 0.0
  %885 = vmatpush1.msra.mxu0 0.0
  %886 = vmatprep.subr.mxu0 0.0
  %887 = vmatpush1.msra.mxu0 0.0
  %888 = vmatprep.subr.mxu0 0.0
  %889 = vmatpush1.msra.mxu0 0.0
  %890 = vmatprep.mubr.f32.mxu0 0.0
  %891 = vmatmul.mubr.f32.gmra.mrb[0].mxu0 %v824
  %v892 = vpop.f32.mrb[0].mxu0
  %v893 = vadd.f32 0.0, %v892
  %v894 = vpop.f32.mrb[0].mxu0
  %895 = vdwg.mxu0
  %897 = vrot.lane.b32.xlu0 %v820, 80
  %v898 = vpop.permute.xlu0 %897
  %v899 = vsel %vm202, %v898, 0
  %901 = vmatprep.subr.mxu0 0.0
  %902 = vmatpush1.msra.mxu0 %v34
  %903 = vmatprep.subr.mxu0 0.0
  %904 = vmatpush1.msra.mxu0 %v35
  %905 = vmatprep.subr.mxu0 0.0
  %906 = vmatpush1.msra.mxu0 0.0
  %907 = vmatprep.subr.mxu0 0.0
  %908 = vmatpush1.msra.mxu0 0.0
  %909 = vmatprep.subr.mxu0 0.0
  %910 = vmatpush1.msra.mxu0 0.0
  %911 = vmatprep.subr.mxu0 0.0
  %912 = vmatpush1.msra.mxu0 0.0
  %913 = vmatprep.subr.mxu0 0.0
  %914 = vmatpush1.msra.mxu0 0.0
  %915 = vmatprep.subr.mxu0 0.0
  %916 = vmatpush1.msra.mxu0 0.0
  %917 = vmatprep.subr.mxu0 0.0
  %918 = vmatpush1.msra.mxu0 0.0
  %919 = vmatprep.subr.mxu0 0.0
  %920 = vmatpush1.msra.mxu0 0.0
  %921 = vmatprep.subr.mxu0 0.0
  %922 = vmatpush1.msra.mxu0 0.0
  %923 = vmatprep.subr.mxu0 0.0
  %924 = vmatpush1.msra.mxu0 0.0
  %925 = vmatprep.subr.mxu0 0.0
  %926 = vmatpush1.msra.mxu0 0.0
  %927 = vmatprep.subr.mxu0 0.0
  %928 = vmatpush1.msra.mxu0 0.0
  %929 = vmatprep.subr.mxu0 0.0
  %930 = vmatpush1.msra.mxu0 0.0
  %931 = vmatprep.subr.mxu0 0.0
  %932 = vmatpush1.msra.mxu0 0.0
  %933 = vmatprep.subr.mxu0 0.0
  %934 = vmatpush1.msra.mxu0 0.0
  %935 = vmatprep.subr.mxu0 0.0
  %936 = vmatpush1.msra.mxu0 0.0
  %937 = vmatprep.subr.mxu0 0.0
  %938 = vmatpush1.msra.mxu0 0.0
  %939 = vmatprep.subr.mxu0 0.0
  %940 = vmatpush1.msra.mxu0 0.0
  %941 = vmatprep.subr.mxu0 0.0
  %942 = vmatpush1.msra.mxu0 0.0
  %943 = vmatprep.subr.mxu0 0.0
  %944 = vmatpush1.msra.mxu0 0.0
  %945 = vmatprep.subr.mxu0 0.0
  %946 = vmatpush1.msra.mxu0 0.0
  %947 = vmatprep.subr.mxu0 0.0
  %948 = vmatpush1.msra.mxu0 0.0
  %949 = vmatprep.subr.mxu0 0.0
  %950 = vmatpush1.msra.mxu0 0.0
  %951 = vmatprep.subr.mxu0 0.0
  %952 = vmatpush1.msra.mxu0 0.0
  %953 = vmatprep.subr.mxu0 0.0
  %954 = vmatpush1.msra.mxu0 0.0
  %955 = vmatprep.subr.mxu0 0.0
  %956 = vmatpush1.msra.mxu0 0.0
  %957 = vmatprep.subr.mxu0 0.0
  %958 = vmatpush1.msra.mxu0 0.0
  %959 = vmatprep.subr.mxu0 0.0
  %960 = vmatpush1.msra.mxu0 0.0
  %961 = vmatprep.subr.mxu0 0.0
  %962 = vmatpush1.msra.mxu0 0.0
  %963 = vmatprep.subr.mxu0 0.0
  %964 = vmatpush1.msra.mxu0 0.0
  %965 = vmatprep.mubr.f32.mxu0 0.0
  %966 = vmatmul.mubr.f32.gmra.mrb[0].mxu0 %v899
  %v967 = vpop.f32.mrb[0].mxu0
  %v968 = vadd.f32 %v893, %v967
  %v969 = vpop.f32.mrb[0].mxu0
  %970 = vdwg.mxu0
  %v971 = vadd.f32 %v968, %v193
  %v972 = vmul.f32 %v971, %v200
  %v973 = vtanh.pop %v972
  %v974 = vmul.f32 %v200, %v973
  %v975 = vadd.f32 %v974, %v201
  %v976 = vmul.f32 %v975, %v722
  %978 = vrot.lane.b32.xlu0 %v975, 96
  %v979 = vpop.permute.xlu0 %978
  %v981 = vmul.f32 %v975, %v979
  %983 = vrot.lane.b32.xlu0 %v981, 16
  %v984 = vpop.permute.xlu0 %983
  %v986 = vadd.f32 %v976, %v984
  %v987 = vtanh.pop %v986
  %989 = vrot.lane.b32.xlu0 %v987, 32
  %v990 = vpop.permute.xlu0 %989
  %v992 = vmul.f32 %v975, %v990
  %993 = vmatprep.subr.mxu0 0.0
  %994 = vmatpush1.msra.mxu0 %v32
  %995 = vmatprep.subr.mxu0 0.0
  %996 = vmatpush1.msra.mxu0 %v33
  %997 = vmatprep.subr.mxu0 0.0
  %998 = vmatpush1.msra.mxu0 0.0
  %999 = vmatprep.subr.mxu0 0.0
  %1000 = vmatpush1.msra.mxu0 0.0
  %1001 = vmatprep.subr.mxu0 0.0
  %1002 = vmatpush1.msra.mxu0 0.0
  %1003 = vmatprep.subr.mxu0 0.0
  %1004 = vmatpush1.msra.mxu0 0.0
  %1005 = vmatprep.subr.mxu0 0.0
  %1006 = vmatpush1.msra.mxu0 0.0
  %1007 = vmatprep.subr.mxu0 0.0
  %1008 = vmatpush1.msra.mxu0 0.0
  %1009 = vmatprep.subr.mxu0 0.0
  %1010 = vmatpush1.msra.mxu0 0.0
  %1011 = vmatprep.subr.mxu0 0.0
  %1012 = vmatpush1.msra.mxu0 0.0
  %1013 = vmatprep.subr.mxu0 0.0
  %1014 = vmatpush1.msra.mxu0 0.0
  %1015 = vmatprep.subr.mxu0 0.0
  %1016 = vmatpush1.msra.mxu0 0.0
  %1017 = vmatprep.subr.mxu0 0.0
  %1018 = vmatpush1.msra.mxu0 0.0
  %1019 = vmatprep.subr.mxu0 0.0
  %1020 = vmatpush1.msra.mxu0 0.0
  %1021 = vmatprep.subr.mxu0 0.0
  %1022 = vmatpush1.msra.mxu0 0.0
  %1023 = vmatprep.subr.mxu0 0.0
  %1024 = vmatpush1.msra.mxu0 0.0
  %1025 = vmatprep.subr.mxu0 0.0
  %1026 = vmatpush1.msra.mxu0 0.0
  %1027 = vmatprep.subr.mxu0 0.0
  %1028 = vmatpush1.msra.mxu0 0.0
  %1029 = vmatprep.subr.mxu0 0.0
  %1030 = vmatpush1.msra.mxu0 0.0
  %1031 = vmatprep.subr.mxu0 0.0
  %1032 = vmatpush1.msra.mxu0 0.0
  %1033 = vmatprep.subr.mxu0 0.0
  %1034 = vmatpush1.msra.mxu0 0.0
  %1035 = vmatprep.subr.mxu0 0.0
  %1036 = vmatpush1.msra.mxu0 0.0
  %1037 = vmatprep.subr.mxu0 0.0
  %1038 = vmatpush1.msra.mxu0 0.0
  %1039 = vmatprep.subr.mxu0 0.0
  %1040 = vmatpush1.msra.mxu0 0.0
  %1041 = vmatprep.subr.mxu0 0.0
  %1042 = vmatpush1.msra.mxu0 0.0
  %1043 = vmatprep.subr.mxu0 0.0
  %1044 = vmatpush1.msra.mxu0 0.0
  %1045 = vmatprep.subr.mxu0 0.0
  %1046 = vmatpush1.msra.mxu0 0.0
  %1047 = vmatprep.subr.mxu0 0.0
  %1048 = vmatpush1.msra.mxu0 0.0
  %1049 = vmatprep.subr.mxu0 0.0
  %1050 = vmatpush1.msra.mxu0 0.0
  %1051 = vmatprep.subr.mxu0 0.0
  %1052 = vmatpush1.msra.mxu0 0.0
  %1053 = vmatprep.subr.mxu0 0.0
  %1054 = vmatpush1.msra.mxu0 0.0
  %1055 = vmatprep.subr.mxu0 0.0
  %1056 = vmatpush1.msra.mxu0 0.0
  %1057 = vmatprep.mubr.f32.mxu0 0.0
  %1058 = vmatmul.mubr.f32.gmra.mrb[0].mxu0 %v899
  %v1059 = vpop.f32.mrb[0].mxu0
  %v1060 = vadd.f32 0.0, %v1059
  %v1061 = vpop.f32.mrb[0].mxu0
  %1062 = vdwg.mxu0
  %v1063 = vadd.f32 %v165, %v1060
  %v1064 = vmul.f32 %v1063, %v200
  %v1065 = vtanh.pop %v1064
  %v1066 = vmul.f32 %v200, %v1065
  %v1067 = vadd.f32 %v1066, %v201
  %v1068 = vmul.f32 %v1067, %v814
  %1070 = vrot.lane.b32.xlu0 %v1067, 96
  %v1071 = vpop.permute.xlu0 %1070
  %v1073 = vmul.f32 %v1067, %v1071
  %1075 = vrot.lane.b32.xlu0 %v1073, 16
  %v1076 = vpop.permute.xlu0 %1075
  %v1078 = vadd.f32 %v1068, %v1076
  %v1079 = vtanh.pop %v1078
  %1081 = vrot.lane.b32.xlu0 %v1079, 32
  %v1082 = vpop.permute.xlu0 %1081
  %v1084 = vmul.f32 %v1067, %v1082
  %1086 = vrot.lane.b32.xlu0 %v992, 80
  %v1087 = vpop.permute.xlu0 %1086
  %v1088 = vsel %vm202, %v1087, 0
  %1090 = vmatprep.subr.mxu0 0.0
  %1091 = vmatpush1.msra.mxu0 %v36
  %1092 = vmatprep.subr.mxu0 0.0
  %1093 = vmatpush1.msra.mxu0 %v37
  %1094 = vmatprep.subr.mxu0 0.0
  %1095 = vmatpush1.msra.mxu0 0.0
  %1096 = vmatprep.subr.mxu0 0.0
  %1097 = vmatpush1.msra.mxu0 0.0
  %1098 = vmatprep.subr.mxu0 0.0
  %1099 = vmatpush1.msra.mxu0 0.0
  %1100 = vmatprep.subr.mxu0 0.0
  %1101 = vmatpush1.msra.mxu0 0.0
  %1102 = vmatprep.subr.mxu0 0.0
  %1103 = vmatpush1.msra.mxu0 0.0
  %1104 = vmatprep.subr.mxu0 0.0
  %1105 = vmatpush1.msra.mxu0 0.0
  %1106 = vmatprep.subr.mxu0 0.0
  %1107 = vmatpush1.msra.mxu0 0.0
  %1108 = vmatprep.subr.mxu0 0.0
  %1109 = vmatpush1.msra.mxu0 0.0
  %1110 = vmatprep.subr.mxu0 0.0
  %1111 = vmatpush1.msra.mxu0 0.0
  %1112 = vmatprep.subr.mxu0 0.0
  %1113 = vmatpush1.msra.mxu0 0.0
  %1114 = vmatprep.subr.mxu0 0.0
  %1115 = vmatpush1.msra.mxu0 0.0
  %1116 = vmatprep.subr.mxu0 0.0
  %1117 = vmatpush1.msra.mxu0 0.0
  %1118 = vmatprep.subr.mxu0 0.0
  %1119 = vmatpush1.msra.mxu0 0.0
  %1120 = vmatprep.subr.mxu0 0.0
  %1121 = vmatpush1.msra.mxu0 0.0
  %1122 = vmatprep.subr.mxu0 0.0
  %1123 = vmatpush1.msra.mxu0 0.0
  %1124 = vmatprep.subr.mxu0 0.0
  %1125 = vmatpush1.msra.mxu0 0.0
  %1126 = vmatprep.subr.mxu0 0.0
  %1127 = vmatpush1.msra.mxu0 0.0
  %1128 = vmatprep.subr.mxu0 0.0
  %1129 = vmatpush1.msra.mxu0 0.0
  %1130 = vmatprep.subr.mxu0 0.0
  %1131 = vmatpush1.msra.mxu0 0.0
  %1132 = vmatprep.subr.mxu0 0.0
  %1133 = vmatpush1.msra.mxu0 0.0
  %1134 = vmatprep.subr.mxu0 0.0
  %1135 = vmatpush1.msra.mxu0 0.0
  %1136 = vmatprep.subr.mxu0 0.0
  %1137 = vmatpush1.msra.mxu0 0.0
  %1138 = vmatprep.subr.mxu0 0.0
  %1139 = vmatpush1.msra.mxu0 0.0
  %1140 = vmatprep.subr.mxu0 0.0
  %1141 = vmatpush1.msra.mxu0 0.0
  %1142 = vmatprep.subr.mxu0 0.0
  %1143 = vmatpush1.msra.mxu0 0.0
  %1144 = vmatprep.subr.mxu0 0.0
  %1145 = vmatpush1.msra.mxu0 0.0
  %1146 = vmatprep.subr.mxu0 0.0
  %1147 = vmatpush1.msra.mxu0 0.0
  %1148 = vmatprep.subr.mxu0 0.0
  %1149 = vmatpush1.msra.mxu0 0.0
  %1150 = vmatprep.subr.mxu0 0.0
  %1151 = vmatpush1.msra.mxu0 0.0
  %1152 = vmatprep.subr.mxu0 0.0
  %1153 = vmatpush1.msra.mxu0 0.0
  %1154 = vmatprep.mubr.f32.mxu0 0.0
  %1155 = vmatmul.mubr.f32.gmra.mrb[0].mxu0 %v1088
  %v1156 = vpop.f32.mrb[0].mxu0
  %v1157 = vadd.f32 0.0, %v1156
  %v1158 = vpop.f32.mrb[0].mxu0
  %1159 = vdwg.mxu0
  %1161 = vrot.lane.b32.xlu0 %v1084, 80
  %v1162 = vpop.permute.xlu0 %1161
  %v1163 = vsel %vm202, %v1162, 0
  %1165 = vmatprep.subr.mxu0 0.0
  %1166 = vmatpush1.msra.mxu0 %v34
  %1167 = vmatprep.subr.mxu0 0.0
  %1168 = vmatpush1.msra.mxu0 %v35
  %1169 = vmatprep.subr.mxu0 0.0
  %1170 = vmatpush1.msra.mxu0 0.0
  %1171 = vmatprep.subr.mxu0 0.0
  %1172 = vmatpush1.msra.mxu0 0.0
  %1173 = vmatprep.subr.mxu0 0.0
  %1174 = vmatpush1.msra.mxu0 0.0
  %1175 = vmatprep.subr.mxu0 0.0
  %1176 = vmatpush1.msra.mxu0 0.0
  %1177 = vmatprep.subr.mxu0 0.0
  %1178 = vmatpush1.msra.mxu0 0.0
  %1179 = vmatprep.subr.mxu0 0.0
  %1180 = vmatpush1.msra.mxu0 0.0
  %1181 = vmatprep.subr.mxu0 0.0
  %1182 = vmatpush1.msra.mxu0 0.0
  %1183 = vmatprep.subr.mxu0 0.0
  %1184 = vmatpush1.msra.mxu0 0.0
  %1185 = vmatprep.subr.mxu0 0.0
  %1186 = vmatpush1.msra.mxu0 0.0
  %1187 = vmatprep.subr.mxu0 0.0
  %1188 = vmatpush1.msra.mxu0 0.0
  %1189 = vmatprep.subr.mxu0 0.0
  %1190 = vmatpush1.msra.mxu0 0.0
  %1191 = vmatprep.subr.mxu0 0.0
  %1192 = vmatpush1.msra.mxu0 0.0
  %1193 = vmatprep.subr.mxu0 0.0
  %1194 = vmatpush1.msra.mxu0 0.0
  %1195 = vmatprep.subr.mxu0 0.0
  %1196 = vmatpush1.msra.mxu0 0.0
  %1197 = vmatprep.subr.mxu0 0.0
  %1198 = vmatpush1.msra.mxu0 0.0
  %1199 = vmatprep.subr.mxu0 0.0
  %1200 = vmatpush1.msra.mxu0 0.0
  %1201 = vmatprep.subr.mxu0 0.0
  %1202 = vmatpush1.msra.mxu0 0.0
  %1203 = vmatprep.subr.mxu0 0.0
  %1204 = vmatpush1.msra.mxu0 0.0
  %1205 = vmatprep.subr.mxu0 0.0
  %1206 = vmatpush1.msra.mxu0 0.0
  %1207 = vmatprep.subr.mxu0 0.0
  %1208 = vmatpush1.msra.mxu0 0.0
  %1209 = vmatprep.subr.mxu0 0.0
  %1210 = vmatpush1.msra.mxu0 0.0
  %1211 = vmatprep.subr.mxu0 0.0
  %1212 = vmatpush1.msra.mxu0 0.0
  %1213 = vmatprep.subr.mxu0 0.0
  %1214 = vmatpush1.msra.mxu0 0.0
  %1215 = vmatprep.subr.mxu0 0.0
  %1216 = vmatpush1.msra.mxu0 0.0
  %1217 = vmatprep.subr.mxu0 0.0
  %1218 = vmatpush1.msra.mxu0 0.0
  %1219 = vmatprep.subr.mxu0 0.0
  %1220 = vmatpush1.msra.mxu0 0.0
  %1221 = vmatprep.subr.mxu0 0.0
  %1222 = vmatpush1.msra.mxu0 0.0
  %1223 = vmatprep.subr.mxu0 0.0
  %1224 = vmatpush1.msra.mxu0 0.0
  %1225 = vmatprep.subr.mxu0 0.0
  %1226 = vmatpush1.msra.mxu0 0.0
  %1227 = vmatprep.subr.mxu0 0.0
  %1228 = vmatpush1.msra.mxu0 0.0
  %1229 = vmatprep.mubr.f32.mxu0 0.0
  %1230 = vmatmul.mubr.f32.gmra.mrb[0].mxu0 %v1163
  %v1231 = vpop.f32.mrb[0].mxu0
  %v1232 = vadd.f32 %v1157, %v1231
  %v1233 = vpop.f32.mrb[0].mxu0
  %1234 = vdwg.mxu0
  %v1235 = vadd.f32 %v1232, %v193
  %v1236 = vmul.f32 %v1235, %v200
  %v1237 = vtanh.pop %v1236
  %v1238 = vmul.f32 %v200, %v1237
  %v1239 = vadd.f32 %v1238, %v201
  %v1240 = vmul.f32 %v1239, %v986
  %1242 = vrot.lane.b32.xlu0 %v1239, 96
  %v1243 = vpop.permute.xlu0 %1242
  %v1245 = vmul.f32 %v1239, %v1243
  %1247 = vrot.lane.b32.xlu0 %v1245, 16
  %v1248 = vpop.permute.xlu0 %1247
  %v1250 = vadd.f32 %v1240, %v1248
  %v1251 = vtanh.pop %v1250
  %1253 = vrot.lane.b32.xlu0 %v1251, 32
  %v1254 = vpop.permute.xlu0 %1253
  %v1256 = vmul.f32 %v1239, %v1254
  %1257 = vmatprep.subr.mxu0 0.0
  %1258 = vmatpush1.msra.mxu0 %v32
  %1259 = vmatprep.subr.mxu0 0.0
  %1260 = vmatpush1.msra.mxu0 %v33
  %1261 = vmatprep.subr.mxu0 0.0
  %1262 = vmatpush1.msra.mxu0 0.0
  %1263 = vmatprep.subr.mxu0 0.0
  %1264 = vmatpush1.msra.mxu0 0.0
  %1265 = vmatprep.subr.mxu0 0.0
  %1266 = vmatpush1.msra.mxu0 0.0
  %1267 = vmatprep.subr.mxu0 0.0
  %1268 = vmatpush1.msra.mxu0 0.0
  %1269 = vmatprep.subr.mxu0 0.0
  %1270 = vmatpush1.msra.mxu0 0.0
  %1271 = vmatprep.subr.mxu0 0.0
  %1272 = vmatpush1.msra.mxu0 0.0
  %1273 = vmatprep.subr.mxu0 0.0
  %1274 = vmatpush1.msra.mxu0 0.0
  %1275 = vmatprep.subr.mxu0 0.0
  %1276 = vmatpush1.msra.mxu0 0.0
  %1277 = vmatprep.subr.mxu0 0.0
  %1278 = vmatpush1.msra.mxu0 0.0
  %1279 = vmatprep.subr.mxu0 0.0
  %1280 = vmatpush1.msra.mxu0 0.0
  %1281 = vmatprep.subr.mxu0 0.0
  %1282 = vmatpush1.msra.mxu0 0.0
  %1283 = vmatprep.subr.mxu0 0.0
  %1284 = vmatpush1.msra.mxu0 0.0
  %1285 = vmatprep.subr.mxu0 0.0
  %1286 = vmatpush1.msra.mxu0 0.0
  %1287 = vmatprep.subr.mxu0 0.0
  %1288 = vmatpush1.msra.mxu0 0.0
  %1289 = vmatprep.subr.mxu0 0.0
  %1290 = vmatpush1.msra.mxu0 0.0
  %1291 = vmatprep.subr.mxu0 0.0
  %1292 = vmatpush1.msra.mxu0 0.0
  %1293 = vmatprep.subr.mxu0 0.0
  %1294 = vmatpush1.msra.mxu0 0.0
  %1295 = vmatprep.subr.mxu0 0.0
  %1296 = vmatpush1.msra.mxu0 0.0
  %1297 = vmatprep.subr.mxu0 0.0
  %1298 = vmatpush1.msra.mxu0 0.0
  %1299 = vmatprep.subr.mxu0 0.0
  %1300 = vmatpush1.msra.mxu0 0.0
  %1301 = vmatprep.subr.mxu0 0.0
  %1302 = vmatpush1.msra.mxu0 0.0
  %1303 = vmatprep.subr.mxu0 0.0
  %1304 = vmatpush1.msra.mxu0 0.0
  %1305 = vmatprep.subr.mxu0 0.0
  %1306 = vmatpush1.msra.mxu0 0.0
  %1307 = vmatprep.subr.mxu0 0.0
  %1308 = vmatpush1.msra.mxu0 0.0
  %1309 = vmatprep.subr.mxu0 0.0
  %1310 = vmatpush1.msra.mxu0 0.0
  %1311 = vmatprep.subr.mxu0 0.0
  %1312 = vmatpush1.msra.mxu0 0.0
  %1313 = vmatprep.subr.mxu0 0.0
  %1314 = vmatpush1.msra.mxu0 0.0
  %1315 = vmatprep.subr.mxu0 0.0
  %1316 = vmatpush1.msra.mxu0 0.0
  %1317 = vmatprep.subr.mxu0 0.0
  %1318 = vmatpush1.msra.mxu0 0.0
  %1319 = vmatprep.subr.mxu0 0.0
  %1320 = vmatpush1.msra.mxu0 0.0
  %1321 = vmatprep.mubr.f32.mxu0 0.0
  %1322 = vmatmul.mubr.f32.gmra.mrb[0].mxu0 %v1163
  %v1323 = vpop.f32.mrb[0].mxu0
  %v1324 = vadd.f32 0.0, %v1323
  %v1325 = vpop.f32.mrb[0].mxu0
  %1326 = vdwg.mxu0
  %v1327 = vadd.f32 %v170, %v1324
  %v1328 = vmul.f32 %v1327, %v200
  %v1329 = vtanh.pop %v1328
  %v1330 = vmul.f32 %v200, %v1329
  %v1331 = vadd.f32 %v1330, %v201
  %v1332 = vmul.f32 %v1331, %v1078
  %1334 = vrot.lane.b32.xlu0 %v1331, 96
  %v1335 = vpop.permute.xlu0 %1334
  %v1337 = vmul.f32 %v1331, %v1335
  %1339 = vrot.lane.b32.xlu0 %v1337, 16
  %v1340 = vpop.permute.xlu0 %1339
  %v1342 = vadd.f32 %v1332, %v1340
  %v1343 = vtanh.pop %v1342
  %1345 = vrot.lane.b32.xlu0 %v1343, 32
  %v1346 = vpop.permute.xlu0 %1345
  %v1348 = vmul.f32 %v1331, %v1346
  %1350 = vrot.lane.b32.xlu0 %v1256, 80
  %v1351 = vpop.permute.xlu0 %1350
  %v1352 = vsel %vm202, %v1351, 0
  %1354 = vmatprep.subr.mxu0 0.0
  %1355 = vmatpush1.msra.mxu0 %v36
  %1356 = vmatprep.subr.mxu0 0.0
  %1357 = vmatpush1.msra.mxu0 %v37
  %1358 = vmatprep.subr.mxu0 0.0
  %1359 = vmatpush1.msra.mxu0 0.0
  %1360 = vmatprep.subr.mxu0 0.0
  %1361 = vmatpush1.msra.mxu0 0.0
  %1362 = vmatprep.subr.mxu0 0.0
  %1363 = vmatpush1.msra.mxu0 0.0
  %1364 = vmatprep.subr.mxu0 0.0
  %1365 = vmatpush1.msra.mxu0 0.0
  %1366 = vmatprep.subr.mxu0 0.0
  %1367 = vmatpush1.msra.mxu0 0.0
  %1368 = vmatprep.subr.mxu0 0.0
  %1369 = vmatpush1.msra.mxu0 0.0
  %1370 = vmatprep.subr.mxu0 0.0
  %1371 = vmatpush1.msra.mxu0 0.0
  %1372 = vmatprep.subr.mxu0 0.0
  %1373 = vmatpush1.msra.mxu0 0.0
  %1374 = vmatprep.subr.mxu0 0.0
  %1375 = vmatpush1.msra.mxu0 0.0
  %1376 = vmatprep.subr.mxu0 0.0
  %1377 = vmatpush1.msra.mxu0 0.0
  %1378 = vmatprep.subr.mxu0 0.0
  %1379 = vmatpush1.msra.mxu0 0.0
  %1380 = vmatprep.subr.mxu0 0.0
  %1381 = vmatpush1.msra.mxu0 0.0
  %1382 = vmatprep.subr.mxu0 0.0
  %1383 = vmatpush1.msra.mxu0 0.0
  %1384 = vmatprep.subr.mxu0 0.0
  %1385 = vmatpush1.msra.mxu0 0.0
  %1386 = vmatprep.subr.mxu0 0.0
  %1387 = vmatpush1.msra.mxu0 0.0
  %1388 = vmatprep.subr.mxu0 0.0
  %1389 = vmatpush1.msra.mxu0 0.0
  %1390 = vmatprep.subr.mxu0 0.0
  %1391 = vmatpush1.msra.mxu0 0.0
  %1392 = vmatprep.subr.mxu0 0.0
  %1393 = vmatpush1.msra.mxu0 0.0
  %1394 = vmatprep.subr.mxu0 0.0
  %1395 = vmatpush1.msra.mxu0 0.0
  %1396 = vmatprep.subr.mxu0 0.0
  %1397 = vmatpush1.msra.mxu0 0.0
  %1398 = vmatprep.subr.mxu0 0.0
  %1399 = vmatpush1.msra.mxu0 0.0
  %1400 = vmatprep.subr.mxu0 0.0
  %1401 = vmatpush1.msra.mxu0 0.0
  %1402 = vmatprep.subr.mxu0 0.0
  %1403 = vmatpush1.msra.mxu0 0.0
  %1404 = vmatprep.subr.mxu0 0.0
  %1405 = vmatpush1.msra.mxu0 0.0
  %1406 = vmatprep.subr.mxu0 0.0
  %1407 = vmatpush1.msra.mxu0 0.0
  %1408 = vmatprep.subr.mxu0 0.0
  %1409 = vmatpush1.msra.mxu0 0.0
  %1410 = vmatprep.subr.mxu0 0.0
  %1411 = vmatpush1.msra.mxu0 0.0
  %1412 = vmatprep.subr.mxu0 0.0
  %1413 = vmatpush1.msra.mxu0 0.0
  %1414 = vmatprep.subr.mxu0 0.0
  %1415 = vmatpush1.msra.mxu0 0.0
  %1416 = vmatprep.subr.mxu0 0.0
  %1417 = vmatpush1.msra.mxu0 0.0
  %1418 = vmatprep.mubr.f32.mxu0 0.0
  %1419 = vmatmul.mubr.f32.gmra.mrb[0].mxu0 %v1352
  %v1420 = vpop.f32.mrb[0].mxu0
  %v1421 = vadd.f32 0.0, %v1420
  %v1422 = vpop.f32.mrb[0].mxu0
  %1423 = vdwg.mxu0
  %1425 = vrot.lane.b32.xlu0 %v1348, 80
  %v1426 = vpop.permute.xlu0 %1425
  %v1427 = vsel %vm202, %v1426, 0
  %1429 = vmatprep.subr.mxu0 0.0
  %1430 = vmatpush1.msra.mxu0 %v34
  %1431 = vmatprep.subr.mxu0 0.0
  %1432 = vmatpush1.msra.mxu0 %v35
  %1433 = vmatprep.subr.mxu0 0.0
  %1434 = vmatpush1.msra.mxu0 0.0
  %1435 = vmatprep.subr.mxu0 0.0
  %1436 = vmatpush1.msra.mxu0 0.0
  %1437 = vmatprep.subr.mxu0 0.0
  %1438 = vmatpush1.msra.mxu0 0.0
  %1439 = vmatprep.subr.mxu0 0.0
  %1440 = vmatpush1.msra.mxu0 0.0
  %1441 = vmatprep.subr.mxu0 0.0
  %1442 = vmatpush1.msra.mxu0 0.0
  %1443 = vmatprep.subr.mxu0 0.0
  %1444 = vmatpush1.msra.mxu0 0.0
  %1445 = vmatprep.subr.mxu0 0.0
  %1446 = vmatpush1.msra.mxu0 0.0
  %1447 = vmatprep.subr.mxu0 0.0
  %1448 = vmatpush1.msra.mxu0 0.0
  %1449 = vmatprep.subr.mxu0 0.0
  %1450 = vmatpush1.msra.mxu0 0.0
  %1451 = vmatprep.subr.mxu0 0.0
  %1452 = vmatpush1.msra.mxu0 0.0
  %1453 = vmatprep.subr.mxu0 0.0
  %1454 = vmatpush1.msra.mxu0 0.0
  %1455 = vmatprep.subr.mxu0 0.0
  %1456 = vmatpush1.msra.mxu0 0.0
  %1457 = vmatprep.subr.mxu0 0.0
  %1458 = vmatpush1.msra.mxu0 0.0
  %1459 = vmatprep.subr.mxu0 0.0
  %1460 = vmatpush1.msra.mxu0 0.0
  %1461 = vmatprep.subr.mxu0 0.0
  %1462 = vmatpush1.msra.mxu0 0.0
  %1463 = vmatprep.subr.mxu0 0.0
  %1464 = vmatpush1.msra.mxu0 0.0
  %1465 = vmatprep.subr.mxu0 0.0
  %1466 = vmatpush1.msra.mxu0 0.0
  %1467 = vmatprep.subr.mxu0 0.0
  %1468 = vmatpush1.msra.mxu0 0.0
  %1469 = vmatprep.subr.mxu0 0.0
  %1470 = vmatpush1.msra.mxu0 0.0
  %1471 = vmatprep.subr.mxu0 0.0
  %1472 = vmatpush1.msra.mxu0 0.0
  %1473 = vmatprep.subr.mxu0 0.0
  %1474 = vmatpush1.msra.mxu0 0.0
  %1475 = vmatprep.subr.mxu0 0.0
  %1476 = vmatpush1.msra.mxu0 0.0
  %1477 = vmatprep.subr.mxu0 0.0
  %1478 = vmatpush1.msra.mxu0 0.0
  %1479 = vmatprep.subr.mxu0 0.0
  %1480 = vmatpush1.msra.mxu0 0.0
  %1481 = vmatprep.subr.mxu0 0.0
  %1482 = vmatpush1.msra.mxu0 0.0
  %1483 = vmatprep.subr.mxu0 0.0
  %1484 = vmatpush1.msra.mxu0 0.0
  %1485 = vmatprep.subr.mxu0 0.0
  %1486 = vmatpush1.msra.mxu0 0.0
  %1487 = vmatprep.subr.mxu0 0.0
  %1488 = vmatpush1.msra.mxu0 0.0
  %1489 = vmatprep.subr.mxu0 0.0
  %1490 = vmatpush1.msra.mxu0 0.0
  %1491 = vmatprep.subr.mxu0 0.0
  %1492 = vmatpush1.msra.mxu0 0.0
  %1493 = vmatprep.mubr.f32.mxu0 0.0
  %1494 = vmatmul.mubr.f32.gmra.mrb[0].mxu0 %v1427
  %v1495 = vpop.f32.mrb[0].mxu0
  %v1496 = vadd.f32 %v1421, %v1495
  %v1497 = vpop.f32.mrb[0].mxu0
  %1498 = vdwg.mxu0
  %v1499 = vadd.f32 %v1496, %v193
  %v1500 = vmul.f32 %v1499, %v200
  %v1501 = vtanh.pop %v1500
  %v1502 = vmul.f32 %v200, %v1501
  %v1503 = vadd.f32 %v1502, %v201
  %v1504 = vmul.f32 %v1503, %v1250
  %1506 = vrot.lane.b32.xlu0 %v1503, 96
  %v1507 = vpop.permute.xlu0 %1506
  %v1509 = vmul.f32 %v1503, %v1507
  %1511 = vrot.lane.b32.xlu0 %v1509, 16
  %v1512 = vpop.permute.xlu0 %1511
  %v1514 = vadd.f32 %v1504, %v1512
  %v1515 = vtanh.pop %v1514
  %1517 = vrot.lane.b32.xlu0 %v1515, 32
  %v1518 = vpop.permute.xlu0 %1517
  %v1520 = vmul.f32 %v1503, %v1518
  %1521 = vmatprep.subr.mxu0 0.0
  %1522 = vmatpush1.msra.mxu0 %v32
  %1523 = vmatprep.subr.mxu0 0.0
  %1524 = vmatpush1.msra.mxu0 %v33
  %1525 = vmatprep.subr.mxu0 0.0
  %1526 = vmatpush1.msra.mxu0 0.0
  %1527 = vmatprep.subr.mxu0 0.0
  %1528 = vmatpush1.msra.mxu0 0.0
  %1529 = vmatprep.subr.mxu0 0.0
  %1530 = vmatpush1.msra.mxu0 0.0
  %1531 = vmatprep.subr.mxu0 0.0
  %1532 = vmatpush1.msra.mxu0 0.0
  %1533 = vmatprep.subr.mxu0 0.0
  %1534 = vmatpush1.msra.mxu0 0.0
  %1535 = vmatprep.subr.mxu0 0.0
  %1536 = vmatpush1.msra.mxu0 0.0
  %1537 = vmatprep.subr.mxu0 0.0
  %1538 = vmatpush1.msra.mxu0 0.0
  %1539 = vmatprep.subr.mxu0 0.0
  %1540 = vmatpush1.msra.mxu0 0.0
  %1541 = vmatprep.subr.mxu0 0.0
  %1542 = vmatpush1.msra.mxu0 0.0
  %1543 = vmatprep.subr.mxu0 0.0
  %1544 = vmatpush1.msra.mxu0 0.0
  %1545 = vmatprep.subr.mxu0 0.0
  %1546 = vmatpush1.msra.mxu0 0.0
  %1547 = vmatprep.subr.mxu0 0.0
  %1548 = vmatpush1.msra.mxu0 0.0
  %1549 = vmatprep.subr.mxu0 0.0
  %1550 = vmatpush1.msra.mxu0 0.0
  %1551 = vmatprep.subr.mxu0 0.0
  %1552 = vmatpush1.msra.mxu0 0.0
  %1553 = vmatprep.subr.mxu0 0.0
  %1554 = vmatpush1.msra.mxu0 0.0
  %1555 = vmatprep.subr.mxu0 0.0
  %1556 = vmatpush1.msra.mxu0 0.0
  %1557 = vmatprep.subr.mxu0 0.0
  %1558 = vmatpush1.msra.mxu0 0.0
  %1559 = vmatprep.subr.mxu0 0.0
  %1560 = vmatpush1.msra.mxu0 0.0
  %1561 = vmatprep.subr.mxu0 0.0
  %1562 = vmatpush1.msra.mxu0 0.0
  %1563 = vmatprep.subr.mxu0 0.0
  %1564 = vmatpush1.msra.mxu0 0.0
  %1565 = vmatprep.subr.mxu0 0.0
  %1566 = vmatpush1.msra.mxu0 0.0
  %1567 = vmatprep.subr.mxu0 0.0
  %1568 = vmatpush1.msra.mxu0 0.0
  %1569 = vmatprep.subr.mxu0 0.0
  %1570 = vmatpush1.msra.mxu0 0.0
  %1571 = vmatprep.subr.mxu0 0.0
  %1572 = vmatpush1.msra.mxu0 0.0
  %1573 = vmatprep.subr.mxu0 0.0
  %1574 = vmatpush1.msra.mxu0 0.0
  %1575 = vmatprep.subr.mxu0 0.0
  %1576 = vmatpush1.msra.mxu0 0.0
  %1577 = vmatprep.subr.mxu0 0.0
  %1578 = vmatpush1.msra.mxu0 0.0
  %1579 = vmatprep.subr.mxu0 0.0
  %1580 = vmatpush1.msra.mxu0 0.0
  %1581 = vmatprep.subr.mxu0 0.0
  %1582 = vmatpush1.msra.mxu0 0.0
  %1583 = vmatprep.subr.mxu0 0.0
  %1584 = vmatpush1.msra.mxu0 0.0
  %1585 = vmatprep.mubr.f32.mxu0 0.0
  %1586 = vmatmul.mubr.f32.gmra.mrb[0].mxu0 %v1427
  %v1587 = vpop.f32.mrb[0].mxu0
  %v1588 = vadd.f32 0.0, %v1587
  %v1589 = vpop.f32.mrb[0].mxu0
  %1590 = vdwg.mxu0
  %v1591 = vadd.f32 %v175, %v1588
  %v1592 = vmul.f32 %v1591, %v200
  %v1593 = vtanh.pop %v1592
  %v1594 = vmul.f32 %v200, %v1593
  %v1595 = vadd.f32 %v1594, %v201
  %v1596 = vmul.f32 %v1595, %v1342
  %1598 = vrot.lane.b32.xlu0 %v1595, 96
  %v1599 = vpop.permute.xlu0 %1598
  %v1601 = vmul.f32 %v1595, %v1599
  %1603 = vrot.lane.b32.xlu0 %v1601, 16
  %v1604 = vpop.permute.xlu0 %1603
  %v1606 = vadd.f32 %v1596, %v1604
  %v1607 = vtanh.pop %v1606
  %1609 = vrot.lane.b32.xlu0 %v1607, 32
  %v1610 = vpop.permute.xlu0 %1609
  %v1612 = vmul.f32 %v1595, %v1610
  %1614 = vrot.lane.b32.xlu0 %v1520, 80
  %v1615 = vpop.permute.xlu0 %1614
  %v1616 = vsel %vm202, %v1615, 0
  %1618 = vmatprep.subr.mxu0 0.0
  %1619 = vmatpush1.msra.mxu0 %v36
  %1620 = vmatprep.subr.mxu0 0.0
  %1621 = vmatpush1.msra.mxu0 %v37
  %1622 = vmatprep.subr.mxu0 0.0
  %1623 = vmatpush1.msra.mxu0 0.0
  %1624 = vmatprep.subr.mxu0 0.0
  %1625 = vmatpush1.msra.mxu0 0.0
  %1626 = vmatprep.subr.mxu0 0.0
  %1627 = vmatpush1.msra.mxu0 0.0
  %1628 = vmatprep.subr.mxu0 0.0
  %1629 = vmatpush1.msra.mxu0 0.0
  %1630 = vmatprep.subr.mxu0 0.0
  %1631 = vmatpush1.msra.mxu0 0.0
  %1632 = vmatprep.subr.mxu0 0.0
  %1633 = vmatpush1.msra.mxu0 0.0
  %1634 = vmatprep.subr.mxu0 0.0
  %1635 = vmatpush1.msra.mxu0 0.0
  %1636 = vmatprep.subr.mxu0 0.0
  %1637 = vmatpush1.msra.mxu0 0.0
  %1638 = vmatprep.subr.mxu0 0.0
  %1639 = vmatpush1.msra.mxu0 0.0
  %1640 = vmatprep.subr.mxu0 0.0
  %1641 = vmatpush1.msra.mxu0 0.0
  %1642 = vmatprep.subr.mxu0 0.0
  %1643 = vmatpush1.msra.mxu0 0.0
  %1644 = vmatprep.subr.mxu0 0.0
  %1645 = vmatpush1.msra.mxu0 0.0
  %1646 = vmatprep.subr.mxu0 0.0
  %1647 = vmatpush1.msra.mxu0 0.0
  %1648 = vmatprep.subr.mxu0 0.0
  %1649 = vmatpush1.msra.mxu0 0.0
  %1650 = vmatprep.subr.mxu0 0.0
  %1651 = vmatpush1.msra.mxu0 0.0
  %1652 = vmatprep.subr.mxu0 0.0
  %1653 = vmatpush1.msra.mxu0 0.0
  %1654 = vmatprep.subr.mxu0 0.0
  %1655 = vmatpush1.msra.mxu0 0.0
  %1656 = vmatprep.subr.mxu0 0.0
  %1657 = vmatpush1.msra.mxu0 0.0
  %1658 = vmatprep.subr.mxu0 0.0
  %1659 = vmatpush1.msra.mxu0 0.0
  %1660 = vmatprep.subr.mxu0 0.0
  %1661 = vmatpush1.msra.mxu0 0.0
  %1662 = vmatprep.subr.mxu0 0.0
  %1663 = vmatpush1.msra.mxu0 0.0
  %1664 = vmatprep.subr.mxu0 0.0
  %1665 = vmatpush1.msra.mxu0 0.0
  %1666 = vmatprep.subr.mxu0 0.0
  %1667 = vmatpush1.msra.mxu0 0.0
  %1668 = vmatprep.subr.mxu0 0.0
  %1669 = vmatpush1.msra.mxu0 0.0
  %1670 = vmatprep.subr.mxu0 0.0
  %1671 = vmatpush1.msra.mxu0 0.0
  %1672 = vmatprep.subr.mxu0 0.0
  %1673 = vmatpush1.msra.mxu0 0.0
  %1674 = vmatprep.subr.mxu0 0.0
  %1675 = vmatpush1.msra.mxu0 0.0
  %1676 = vmatprep.subr.mxu0 0.0
  %1677 = vmatpush1.msra.mxu0 0.0
  %1678 = vmatprep.subr.mxu0 0.0
  %1679 = vmatpush1.msra.mxu0 0.0
  %1680 = vmatprep.subr.mxu0 0.0
  %1681 = vmatpush1.msra.mxu0 0.0
  %1682 = vmatprep.mubr.f32.mxu0 0.0
  %1683 = vmatmul.mubr.f32.gmra.mrb[0].mxu0 %v1616
  %v1684 = vpop.f32.mrb[0].mxu0
  %v1685 = vadd.f32 0.0, %v1684
  %v1686 = vpop.f32.mrb[0].mxu0
  %1687 = vdwg.mxu0
  %1689 = vrot.lane.b32.xlu0 %v1612, 80
  %v1690 = vpop.permute.xlu0 %1689
  %v1691 = vsel %vm202, %v1690, 0
  %1693 = vmatprep.subr.mxu0 0.0
  %1694 = vmatpush1.msra.mxu0 %v34
  %1695 = vmatprep.subr.mxu0 0.0
  %1696 = vmatpush1.msra.mxu0 %v35
  %1697 = vmatprep.subr.mxu0 0.0
  %1698 = vmatpush1.msra.mxu0 0.0
  %1699 = vmatprep.subr.mxu0 0.0
  %1700 = vmatpush1.msra.mxu0 0.0
  %1701 = vmatprep.subr.mxu0 0.0
  %1702 = vmatpush1.msra.mxu0 0.0
  %1703 = vmatprep.subr.mxu0 0.0
  %1704 = vmatpush1.msra.mxu0 0.0
  %1705 = vmatprep.subr.mxu0 0.0
  %1706 = vmatpush1.msra.mxu0 0.0
  %1707 = vmatprep.subr.mxu0 0.0
  %1708 = vmatpush1.msra.mxu0 0.0
  %1709 = vmatprep.subr.mxu0 0.0
  %1710 = vmatpush1.msra.mxu0 0.0
  %1711 = vmatprep.subr.mxu0 0.0
  %1712 = vmatpush1.msra.mxu0 0.0
  %1713 = vmatprep.subr.mxu0 0.0
  %1714 = vmatpush1.msra.mxu0 0.0
  %1715 = vmatprep.subr.mxu0 0.0
  %1716 = vmatpush1.msra.mxu0 0.0
  %1717 = vmatprep.subr.mxu0 0.0
  %1718 = vmatpush1.msra.mxu0 0.0
  %1719 = vmatprep.subr.mxu0 0.0
  %1720 = vmatpush1.msra.mxu0 0.0
  %1721 = vmatprep.subr.mxu0 0.0
  %1722 = vmatpush1.msra.mxu0 0.0
  %1723 = vmatprep.subr.mxu0 0.0
  %1724 = vmatpush1.msra.mxu0 0.0
  %1725 = vmatprep.subr.mxu0 0.0
  %1726 = vmatpush1.msra.mxu0 0.0
  %1727 = vmatprep.subr.mxu0 0.0
  %1728 = vmatpush1.msra.mxu0 0.0
  %1729 = vmatprep.subr.mxu0 0.0
  %1730 = vmatpush1.msra.mxu0 0.0
  %1731 = vmatprep.subr.mxu0 0.0
  %1732 = vmatpush1.msra.mxu0 0.0
  %1733 = vmatprep.subr.mxu0 0.0
  %1734 = vmatpush1.msra.mxu0 0.0
  %1735 = vmatprep.subr.mxu0 0.0
  %1736 = vmatpush1.msra.mxu0 0.0
  %1737 = vmatprep.subr.mxu0 0.0
  %1738 = vmatpush1.msra.mxu0 0.0
  %1739 = vmatprep.subr.mxu0 0.0
  %1740 = vmatpush1.msra.mxu0 0.0
  %1741 = vmatprep.subr.mxu0 0.0
  %1742 = vmatpush1.msra.mxu0 0.0
  %1743 = vmatprep.subr.mxu0 0.0
  %1744 = vmatpush1.msra.mxu0 0.0
  %1745 = vmatprep.subr.mxu0 0.0
  %1746 = vmatpush1.msra.mxu0 0.0
  %1747 = vmatprep.subr.mxu0 0.0
  %1748 = vmatpush1.msra.mxu0 0.0
  %1749 = vmatprep.subr.mxu0 0.0
  %1750 = vmatpush1.msra.mxu0 0.0
  %1751 = vmatprep.subr.mxu0 0.0
  %1752 = vmatpush1.msra.mxu0 0.0
  %1753 = vmatprep.subr.mxu0 0.0
  %1754 = vmatpush1.msra.mxu0 0.0
  %1755 = vmatprep.subr.mxu0 0.0
  %1756 = vmatpush1.msra.mxu0 0.0
  %1757 = vmatprep.mubr.f32.mxu0 0.0
  %1758 = vmatmul.mubr.f32.gmra.mrb[0].mxu0 %v1691
  %v1759 = vpop.f32.mrb[0].mxu0
  %v1760 = vadd.f32 %v1685, %v1759
  %v1761 = vpop.f32.mrb[0].mxu0
  %1762 = vdwg.mxu0
  %v1763 = vadd.f32 %v1760, %v193
  %v1764 = vmul.f32 %v1763, %v200
  %v1765 = vtanh.pop %v1764
  %v1766 = vmul.f32 %v200, %v1765
  %v1767 = vadd.f32 %v1766, %v201
  %v1768 = vmul.f32 %v1767, %v1514
  %1770 = vrot.lane.b32.xlu0 %v1767, 96
  %v1771 = vpop.permute.xlu0 %1770
  %v1773 = vmul.f32 %v1767, %v1771
  %1775 = vrot.lane.b32.xlu0 %v1773, 16
  %v1776 = vpop.permute.xlu0 %1775
  %v1778 = vadd.f32 %v1768, %v1776
  %v1779 = vtanh.pop %v1778
  %1781 = vrot.lane.b32.xlu0 %v1779, 32
  %v1782 = vpop.permute.xlu0 %1781
  %v1784 = vmul.f32 %v1767, %v1782
  %1785 = vmatprep.subr.mxu0 0.0
  %1786 = vmatpush1.msra.mxu0 %v32
  %1787 = vmatprep.subr.mxu0 0.0
  %1788 = vmatpush1.msra.mxu0 %v33
  %1789 = vmatprep.subr.mxu0 0.0
  %1790 = vmatpush1.msra.mxu0 0.0
  %1791 = vmatprep.subr.mxu0 0.0
  %1792 = vmatpush1.msra.mxu0 0.0
  %1793 = vmatprep.subr.mxu0 0.0
  %1794 = vmatpush1.msra.mxu0 0.0
  %1795 = vmatprep.subr.mxu0 0.0
  %1796 = vmatpush1.msra.mxu0 0.0
  %1797 = vmatprep.subr.mxu0 0.0
  %1798 = vmatpush1.msra.mxu0 0.0
  %1799 = vmatprep.subr.mxu0 0.0
  %1800 = vmatpush1.msra.mxu0 0.0
  %1801 = vmatprep.subr.mxu0 0.0
  %1802 = vmatpush1.msra.mxu0 0.0
  %1803 = vmatprep.subr.mxu0 0.0
  %1804 = vmatpush1.msra.mxu0 0.0
  %1805 = vmatprep.subr.mxu0 0.0
  %1806 = vmatpush1.msra.mxu0 0.0
  %1807 = vmatprep.subr.mxu0 0.0
  %1808 = vmatpush1.msra.mxu0 0.0
  %1809 = vmatprep.subr.mxu0 0.0
  %1810 = vmatpush1.msra.mxu0 0.0
  %1811 = vmatprep.subr.mxu0 0.0
  %1812 = vmatpush1.msra.mxu0 0.0
  %1813 = vmatprep.subr.mxu0 0.0
  %1814 = vmatpush1.msra.mxu0 0.0
  %1815 = vmatprep.subr.mxu0 0.0
  %1816 = vmatpush1.msra.mxu0 0.0
  %1817 = vmatprep.subr.mxu0 0.0
  %1818 = vmatpush1.msra.mxu0 0.0
  %1819 = vmatprep.subr.mxu0 0.0
  %1820 = vmatpush1.msra.mxu0 0.0
  %1821 = vmatprep.subr.mxu0 0.0
  %1822 = vmatpush1.msra.mxu0 0.0
  %1823 = vmatprep.subr.mxu0 0.0
  %1824 = vmatpush1.msra.mxu0 0.0
  %1825 = vmatprep.subr.mxu0 0.0
  %1826 = vmatpush1.msra.mxu0 0.0
  %1827 = vmatprep.subr.mxu0 0.0
  %1828 = vmatpush1.msra.mxu0 0.0
  %1829 = vmatprep.subr.mxu0 0.0
  %1830 = vmatpush1.msra.mxu0 0.0
  %1831 = vmatprep.subr.mxu0 0.0
  %1832 = vmatpush1.msra.mxu0 0.0
  %1833 = vmatprep.subr.mxu0 0.0
  %1834 = vmatpush1.msra.mxu0 0.0
  %1835 = vmatprep.subr.mxu0 0.0
  %1836 = vmatpush1.msra.mxu0 0.0
  %1837 = vmatprep.subr.mxu0 0.0
  %1838 = vmatpush1.msra.mxu0 0.0
  %1839 = vmatprep.subr.mxu0 0.0
  %1840 = vmatpush1.msra.mxu0 0.0
  %1841 = vmatprep.subr.mxu0 0.0
  %1842 = vmatpush1.msra.mxu0 0.0
  %1843 = vmatprep.subr.mxu0 0.0
  %1844 = vmatpush1.msra.mxu0 0.0
  %1845 = vmatprep.subr.mxu0 0.0
  %1846 = vmatpush1.msra.mxu0 0.0
  %1847 = vmatprep.subr.mxu0 0.0
  %1848 = vmatpush1.msra.mxu0 0.0
  %1849 = vmatprep.mubr.f32.mxu0 0.0
  %1850 = vmatmul.mubr.f32.gmra.mrb[0].mxu0 %v1691
  %v1851 = vpop.f32.mrb[0].mxu0
  %v1852 = vadd.f32 0.0, %v1851
  %v1853 = vpop.f32.mrb[0].mxu0
  %1854 = vdwg.mxu0
  %v1855 = vadd.f32 %v180, %v1852
  %v1856 = vmul.f32 %v1855, %v200
  %v1857 = vtanh.pop %v1856
  %v1858 = vmul.f32 %v200, %v1857
  %v1859 = vadd.f32 %v1858, %v201
  %v1860 = vmul.f32 %v1859, %v1606
  %1862 = vrot.lane.b32.xlu0 %v1859, 96
  %v1863 = vpop.permute.xlu0 %1862
  %v1865 = vmul.f32 %v1859, %v1863
  %1867 = vrot.lane.b32.xlu0 %v1865, 16
  %v1868 = vpop.permute.xlu0 %1867
  %v1870 = vadd.f32 %v1860, %v1868
  %v1871 = vtanh.pop %v1870
  %1873 = vrot.lane.b32.xlu0 %v1871, 32
  %v1874 = vpop.permute.xlu0 %1873
  %v1876 = vmul.f32 %v1859, %v1874
  %1878 = vrot.lane.b32.xlu0 %v1784, 80
  %v1879 = vpop.permute.xlu0 %1878
  %v1880 = vsel %vm202, %v1879, 0
  %1882 = vmatprep.subr.mxu0 0.0
  %1883 = vmatpush1.msra.mxu0 %v36
  %1884 = vmatprep.subr.mxu0 0.0
  %1885 = vmatpush1.msra.mxu0 %v37
  %1886 = vmatprep.subr.mxu0 0.0
  %1887 = vmatpush1.msra.mxu0 0.0
  %1888 = vmatprep.subr.mxu0 0.0
  %1889 = vmatpush1.msra.mxu0 0.0
  %1890 = vmatprep.subr.mxu0 0.0
  %1891 = vmatpush1.msra.mxu0 0.0
  %1892 = vmatprep.subr.mxu0 0.0
  %1893 = vmatpush1.msra.mxu0 0.0
  %1894 = vmatprep.subr.mxu0 0.0
  %1895 = vmatpush1.msra.mxu0 0.0
  %1896 = vmatprep.subr.mxu0 0.0
  %1897 = vmatpush1.msra.mxu0 0.0
  %1898 = vmatprep.subr.mxu0 0.0
  %1899 = vmatpush1.msra.mxu0 0.0
  %1900 = vmatprep.subr.mxu0 0.0
  %1901 = vmatpush1.msra.mxu0 0.0
  %1902 = vmatprep.subr.mxu0 0.0
  %1903 = vmatpush1.msra.mxu0 0.0
  %1904 = vmatprep.subr.mxu0 0.0
  %1905 = vmatpush1.msra.mxu0 0.0
  %1906 = vmatprep.subr.mxu0 0.0
  %1907 = vmatpush1.msra.mxu0 0.0
  %1908 = vmatprep.subr.mxu0 0.0
  %1909 = vmatpush1.msra.mxu0 0.0
  %1910 = vmatprep.subr.mxu0 0.0
  %1911 = vmatpush1.msra.mxu0 0.0
  %1912 = vmatprep.subr.mxu0 0.0
  %1913 = vmatpush1.msra.mxu0 0.0
  %1914 = vmatprep.subr.mxu0 0.0
  %1915 = vmatpush1.msra.mxu0 0.0
  %1916 = vmatprep.subr.mxu0 0.0
  %1917 = vmatpush1.msra.mxu0 0.0
  %1918 = vmatprep.subr.mxu0 0.0
  %1919 = vmatpush1.msra.mxu0 0.0
  %1920 = vmatprep.subr.mxu0 0.0
  %1921 = vmatpush1.msra.mxu0 0.0
  %1922 = vmatprep.subr.mxu0 0.0
  %1923 = vmatpush1.msra.mxu0 0.0
  %1924 = vmatprep.subr.mxu0 0.0
  %1925 = vmatpush1.msra.mxu0 0.0
  %1926 = vmatprep.subr.mxu0 0.0
  %1927 = vmatpush1.msra.mxu0 0.0
  %1928 = vmatprep.subr.mxu0 0.0
  %1929 = vmatpush1.msra.mxu0 0.0
  %1930 = vmatprep.subr.mxu0 0.0
  %1931 = vmatpush1.msra.mxu0 0.0
  %1932 = vmatprep.subr.mxu0 0.0
  %1933 = vmatpush1.msra.mxu0 0.0
  %1934 = vmatprep.subr.mxu0 0.0
  %1935 = vmatpush1.msra.mxu0 0.0
  %1936 = vmatprep.subr.mxu0 0.0
  %1937 = vmatpush1.msra.mxu0 0.0
  %1938 = vmatprep.subr.mxu0 0.0
  %1939 = vmatpush1.msra.mxu0 0.0
  %1940 = vmatprep.subr.mxu0 0.0
  %1941 = vmatpush1.msra.mxu0 0.0
  %1942 = vmatprep.subr.mxu0 0.0
  %1943 = vmatpush1.msra.mxu0 0.0
  %1944 = vmatprep.subr.mxu0 0.0
  %1945 = vmatpush1.msra.mxu0 0.0
  %1946 = vmatprep.mubr.f32.mxu0 0.0
  %1947 = vmatmul.mubr.f32.gmra.mrb[0].mxu0 %v1880
  %v1948 = vpop.f32.mrb[0].mxu0
  %v1949 = vadd.f32 0.0, %v1948
  %v1950 = vpop.f32.mrb[0].mxu0
  %1951 = vdwg.mxu0
  %1953 = vrot.lane.b32.xlu0 %v1876, 80
  %v1954 = vpop.permute.xlu0 %1953
  %v1955 = vsel %vm202, %v1954, 0
  %1957 = vmatprep.subr.mxu0 0.0
  %1958 = vmatpush1.msra.mxu0 %v34
  %1959 = vmatprep.subr.mxu0 0.0
  %1960 = vmatpush1.msra.mxu0 %v35
  %1961 = vmatprep.subr.mxu0 0.0
  %1962 = vmatpush1.msra.mxu0 0.0
  %1963 = vmatprep.subr.mxu0 0.0
  %1964 = vmatpush1.msra.mxu0 0.0
  %1965 = vmatprep.subr.mxu0 0.0
  %1966 = vmatpush1.msra.mxu0 0.0
  %1967 = vmatprep.subr.mxu0 0.0
  %1968 = vmatpush1.msra.mxu0 0.0
  %1969 = vmatprep.subr.mxu0 0.0
  %1970 = vmatpush1.msra.mxu0 0.0
  %1971 = vmatprep.subr.mxu0 0.0
  %1972 = vmatpush1.msra.mxu0 0.0
  %1973 = vmatprep.subr.mxu0 0.0
  %1974 = vmatpush1.msra.mxu0 0.0
  %1975 = vmatprep.subr.mxu0 0.0
  %1976 = vmatpush1.msra.mxu0 0.0
  %1977 = vmatprep.subr.mxu0 0.0
  %1978 = vmatpush1.msra.mxu0 0.0
  %1979 = vmatprep.subr.mxu0 0.0
  %1980 = vmatpush1.msra.mxu0 0.0
  %1981 = vmatprep.subr.mxu0 0.0
  %1982 = vmatpush1.msra.mxu0 0.0
  %1983 = vmatprep.subr.mxu0 0.0
  %1984 = vmatpush1.msra.mxu0 0.0
  %1985 = vmatprep.subr.mxu0 0.0
  %1986 = vmatpush1.msra.mxu0 0.0
  %1987 = vmatprep.subr.mxu0 0.0
  %1988 = vmatpush1.msra.mxu0 0.0
  %1989 = vmatprep.subr.mxu0 0.0
  %1990 = vmatpush1.msra.mxu0 0.0
  %1991 = vmatprep.subr.mxu0 0.0
  %1992 = vmatpush1.msra.mxu0 0.0
  %1993 = vmatprep.subr.mxu0 0.0
  %1994 = vmatpush1.msra.mxu0 0.0
  %1995 = vmatprep.subr.mxu0 0.0
  %1996 = vmatpush1.msra.mxu0 0.0
  %1997 = vmatprep.subr.mxu0 0.0
  %1998 = vmatpush1.msra.mxu0 0.0
  %1999 = vmatprep.subr.mxu0 0.0
  %2000 = vmatpush1.msra.mxu0 0.0
  %2001 = vmatprep.subr.mxu0 0.0
  %2002 = vmatpush1.msra.mxu0 0.0
  %2003 = vmatprep.subr.mxu0 0.0
  %2004 = vmatpush1.msra.mxu0 0.0
  %2005 = vmatprep.subr.mxu0 0.0
  %2006 = vmatpush1.msra.mxu0 0.0
  %2007 = vmatprep.subr.mxu0 0.0
  %2008 = vmatpush1.msra.mxu0 0.0
  %2009 = vmatprep.subr.mxu0 0.0
  %2010 = vmatpush1.msra.mxu0 0.0
  %2011 = vmatprep.subr.mxu0 0.0
  %2012 = vmatpush1.msra.mxu0 0.0
  %2013 = vmatprep.subr.mxu0 0.0
  %2014 = vmatpush1.msra.mxu0 0.0
  %2015 = vmatprep.subr.mxu0 0.0
  %2016 = vmatpush1.msra.mxu0 0.0
  %2017 = vmatprep.subr.mxu0 0.0
  %2018 = vmatpush1.msra.mxu0 0.0
  %2019 = vmatprep.subr.mxu0 0.0
  %2020 = vmatpush1.msra.mxu0 0.0
  %2021 = vmatprep.mubr.f32.mxu0 0.0
  %2022 = vmatmul.mubr.f32.gmra.mrb[0].mxu0 %v1955
  %v2023 = vpop.f32.mrb[0].mxu0
  %v2024 = vadd.f32 %v1949, %v2023
  %v2025 = vpop.f32.mrb[0].mxu0
  %2026 = vdwg.mxu0
  %v2027 = vadd.f32 %v2024, %v193
  %v2028 = vmul.f32 %v2027, %v200
  %v2029 = vtanh.pop %v2028
  %v2030 = vmul.f32 %v200, %v2029
  %v2031 = vadd.f32 %v2030, %v201
  %v2032 = vmul.f32 %v2031, %v1778
  %2034 = vrot.lane.b32.xlu0 %v2031, 96
  %v2035 = vpop.permute.xlu0 %2034
  %v2037 = vmul.f32 %v2031, %v2035
  %2039 = vrot.lane.b32.xlu0 %v2037, 16
  %v2040 = vpop.permute.xlu0 %2039
  %v2042 = vadd.f32 %v2032, %v2040
  %v2043 = vtanh.pop %v2042
  %2045 = vrot.lane.b32.xlu0 %v2043, 32
  %v2046 = vpop.permute.xlu0 %2045
  %v2048 = vmul.f32 %v2031, %v2046
  %2049 = vmatprep.subr.mxu0 0.0
  %2050 = vmatpush1.msra.mxu0 %v32
  %2051 = vmatprep.subr.mxu0 0.0
  %2052 = vmatpush1.msra.mxu0 %v33
  %2053 = vmatprep.subr.mxu0 0.0
  %2054 = vmatpush1.msra.mxu0 0.0
  %2055 = vmatprep.subr.mxu0 0.0
  %2056 = vmatpush1.msra.mxu0 0.0
  %2057 = vmatprep.subr.mxu0 0.0
  %2058 = vmatpush1.msra.mxu0 0.0
  %2059 = vmatprep.subr.mxu0 0.0
  %2060 = vmatpush1.msra.mxu0 0.0
  %2061 = vmatprep.subr.mxu0 0.0
  %2062 = vmatpush1.msra.mxu0 0.0
  %2063 = vmatprep.subr.mxu0 0.0
  %2064 = vmatpush1.msra.mxu0 0.0
  %2065 = vmatprep.subr.mxu0 0.0
  %2066 = vmatpush1.msra.mxu0 0.0
  %2067 = vmatprep.subr.mxu0 0.0
  %2068 = vmatpush1.msra.mxu0 0.0
  %2069 = vmatprep.subr.mxu0 0.0
  %2070 = vmatpush1.msra.mxu0 0.0
  %2071 = vmatprep.subr.mxu0 0.0
  %2072 = vmatpush1.msra.mxu0 0.0
  %2073 = vmatprep.subr.mxu0 0.0
  %2074 = vmatpush1.msra.mxu0 0.0
  %2075 = vmatprep.subr.mxu0 0.0
  %2076 = vmatpush1.msra.mxu0 0.0
  %2077 = vmatprep.subr.mxu0 0.0
  %2078 = vmatpush1.msra.mxu0 0.0
  %2079 = vmatprep.subr.mxu0 0.0
  %2080 = vmatpush1.msra.mxu0 0.0
  %2081 = vmatprep.subr.mxu0 0.0
  %2082 = vmatpush1.msra.mxu0 0.0
  %2083 = vmatprep.subr.mxu0 0.0
  %2084 = vmatpush1.msra.mxu0 0.0
  %2085 = vmatprep.subr.mxu0 0.0
  %2086 = vmatpush1.msra.mxu0 0.0
  %2087 = vmatprep.subr.mxu0 0.0
  %2088 = vmatpush1.msra.mxu0 0.0
  %2089 = vmatprep.subr.mxu0 0.0
  %2090 = vmatpush1.msra.mxu0 0.0
  %2091 = vmatprep.subr.mxu0 0.0
  %2092 = vmatpush1.msra.mxu0 0.0
  %2093 = vmatprep.subr.mxu0 0.0
  %2094 = vmatpush1.msra.mxu0 0.0
  %2095 = vmatprep.subr.mxu0 0.0
  %2096 = vmatpush1.msra.mxu0 0.0
  %2097 = vmatprep.subr.mxu0 0.0
  %2098 = vmatpush1.msra.mxu0 0.0
  %2099 = vmatprep.subr.mxu0 0.0
  %2100 = vmatpush1.msra.mxu0 0.0
  %2101 = vmatprep.subr.mxu0 0.0
  %2102 = vmatpush1.msra.mxu0 0.0
  %2103 = vmatprep.subr.mxu0 0.0
  %2104 = vmatpush1.msra.mxu0 0.0
  %2105 = vmatprep.subr.mxu0 0.0
  %2106 = vmatpush1.msra.mxu0 0.0
  %2107 = vmatprep.subr.mxu0 0.0
  %2108 = vmatpush1.msra.mxu0 0.0
  %2109 = vmatprep.subr.mxu0 0.0
  %2110 = vmatpush1.msra.mxu0 0.0
  %2111 = vmatprep.subr.mxu0 0.0
  %2112 = vmatpush1.msra.mxu0 0.0
  %2113 = vmatprep.mubr.f32.mxu0 0.0
  %2114 = vmatmul.mubr.f32.gmra.mrb[0].mxu0 %v1955
  %v2115 = vpop.f32.mrb[0].mxu0
  %v2116 = vadd.f32 0.0, %v2115
  %v2117 = vpop.f32.mrb[0].mxu0
  %2118 = vdwg.mxu0
  %v2119 = vadd.f32 %v185, %v2116
  %v2120 = vmul.f32 %v2119, %v200
  %v2121 = vtanh.pop %v2120
  %v2122 = vmul.f32 %v200, %v2121
  %v2123 = vadd.f32 %v2122, %v201
  %v2124 = vmul.f32 %v2123, %v1870
  %2126 = vrot.lane.b32.xlu0 %v2123, 96
  %v2127 = vpop.permute.xlu0 %2126
  %v2129 = vmul.f32 %v2123, %v2127
  %2131 = vrot.lane.b32.xlu0 %v2129, 16
  %v2132 = vpop.permute.xlu0 %2131
  %v2134 = vadd.f32 %v2124, %v2132
  %v2135 = vtanh.pop %v2134
  %2137 = vrot.lane.b32.xlu0 %v2135, 32
  %v2138 = vpop.permute.xlu0 %2137
  %v2140 = vmul.f32 %v2123, %v2138
  %2142 = vrot.lane.b32.xlu0 %v2048, 80
  %v2143 = vpop.permute.xlu0 %2142
  %v2144 = vsel %vm202, %v2143, 0
  %2146 = vmatprep.subr.mxu0 0.0
  %2147 = vmatpush1.msra.mxu0 %v36
  %2148 = vmatprep.subr.mxu0 0.0
  %2149 = vmatpush1.msra.mxu0 %v37
  %2150 = vmatprep.subr.mxu0 0.0
  %2151 = vmatpush1.msra.mxu0 0.0
  %2152 = vmatprep.subr.mxu0 0.0
  %2153 = vmatpush1.msra.mxu0 0.0
  %2154 = vmatprep.subr.mxu0 0.0
  %2155 = vmatpush1.msra.mxu0 0.0
  %2156 = vmatprep.subr.mxu0 0.0
  %2157 = vmatpush1.msra.mxu0 0.0
  %2158 = vmatprep.subr.mxu0 0.0
  %2159 = vmatpush1.msra.mxu0 0.0
  %2160 = vmatprep.subr.mxu0 0.0
  %2161 = vmatpush1.msra.mxu0 0.0
  %2162 = vmatprep.subr.mxu0 0.0
  %2163 = vmatpush1.msra.mxu0 0.0
  %2164 = vmatprep.subr.mxu0 0.0
  %2165 = vmatpush1.msra.mxu0 0.0
  %2166 = vmatprep.subr.mxu0 0.0
  %2167 = vmatpush1.msra.mxu0 0.0
  %2168 = vmatprep.subr.mxu0 0.0
  %2169 = vmatpush1.msra.mxu0 0.0
  %2170 = vmatprep.subr.mxu0 0.0
  %2171 = vmatpush1.msra.mxu0 0.0
  %2172 = vmatprep.subr.mxu0 0.0
  %2173 = vmatpush1.msra.mxu0 0.0
  %2174 = vmatprep.subr.mxu0 0.0
  %2175 = vmatpush1.msra.mxu0 0.0
  %2176 = vmatprep.subr.mxu0 0.0
  %2177 = vmatpush1.msra.mxu0 0.0
  %2178 = vmatprep.subr.mxu0 0.0
  %2179 = vmatpush1.msra.mxu0 0.0
  %2180 = vmatprep.subr.mxu0 0.0
  %2181 = vmatpush1.msra.mxu0 0.0
  %2182 = vmatprep.subr.mxu0 0.0
  %2183 = vmatpush1.msra.mxu0 0.0
  %2184 = vmatprep.subr.mxu0 0.0
  %2185 = vmatpush1.msra.mxu0 0.0
  %2186 = vmatprep.subr.mxu0 0.0
  %2187 = vmatpush1.msra.mxu0 0.0
  %2188 = vmatprep.subr.mxu0 0.0
  %2189 = vmatpush1.msra.mxu0 0.0
  %2190 = vmatprep.subr.mxu0 0.0
  %2191 = vmatpush1.msra.mxu0 0.0
  %2192 = vmatprep.subr.mxu0 0.0
  %2193 = vmatpush1.msra.mxu0 0.0
  %2194 = vmatprep.subr.mxu0 0.0
  %2195 = vmatpush1.msra.mxu0 0.0
  %2196 = vmatprep.subr.mxu0 0.0
  %2197 = vmatpush1.msra.mxu0 0.0
  %2198 = vmatprep.subr.mxu0 0.0
  %2199 = vmatpush1.msra.mxu0 0.0
  %2200 = vmatprep.subr.mxu0 0.0
  %2201 = vmatpush1.msra.mxu0 0.0
  %2202 = vmatprep.subr.mxu0 0.0
  %2203 = vmatpush1.msra.mxu0 0.0
  %2204 = vmatprep.subr.mxu0 0.0
  %2205 = vmatpush1.msra.mxu0 0.0
  %2206 = vmatprep.subr.mxu0 0.0
  %2207 = vmatpush1.msra.mxu0 0.0
  %2208 = vmatprep.subr.mxu0 0.0
  %2209 = vmatpush1.msra.mxu0 0.0
  %2210 = vmatprep.mubr.f32.mxu0 0.0
  %2211 = vmatmul.mubr.f32.gmra.mrb[0].mxu0 %v2144
  %v2212 = vpop.f32.mrb[0].mxu0
  %v2213 = vadd.f32 0.0, %v2212
  %v2214 = vpop.f32.mrb[0].mxu0
  %2215 = vdwg.mxu0
  %2217 = vrot.lane.b32.xlu0 %v2140, 80
  %v2218 = vpop.permute.xlu0 %2217
  %v2219 = vsel %vm202, %v2218, 0
  %2221 = vmatprep.subr.mxu0 0.0
  %2222 = vmatpush1.msra.mxu0 %v34
  %2223 = vmatprep.subr.mxu0 0.0
  %2224 = vmatpush1.msra.mxu0 %v35
  %2225 = vmatprep.subr.mxu0 0.0
  %2226 = vmatpush1.msra.mxu0 0.0
  %2227 = vmatprep.subr.mxu0 0.0
  %2228 = vmatpush1.msra.mxu0 0.0
  %2229 = vmatprep.subr.mxu0 0.0
  %2230 = vmatpush1.msra.mxu0 0.0
  %2231 = vmatprep.subr.mxu0 0.0
  %2232 = vmatpush1.msra.mxu0 0.0
  %2233 = vmatprep.subr.mxu0 0.0
  %2234 = vmatpush1.msra.mxu0 0.0
  %2235 = vmatprep.subr.mxu0 0.0
  %2236 = vmatpush1.msra.mxu0 0.0
  %2237 = vmatprep.subr.mxu0 0.0
  %2238 = vmatpush1.msra.mxu0 0.0
  %2239 = vmatprep.subr.mxu0 0.0
  %2240 = vmatpush1.msra.mxu0 0.0
  %2241 = vmatprep.subr.mxu0 0.0
  %2242 = vmatpush1.msra.mxu0 0.0
  %2243 = vmatprep.subr.mxu0 0.0
  %2244 = vmatpush1.msra.mxu0 0.0
  %2245 = vmatprep.subr.mxu0 0.0
  %2246 = vmatpush1.msra.mxu0 0.0
  %2247 = vmatprep.subr.mxu0 0.0
  %2248 = vmatpush1.msra.mxu0 0.0
  %2249 = vmatprep.subr.mxu0 0.0
  %2250 = vmatpush1.msra.mxu0 0.0
  %2251 = vmatprep.subr.mxu0 0.0
  %2252 = vmatpush1.msra.mxu0 0.0
  %2253 = vmatprep.subr.mxu0 0.0
  %2254 = vmatpush1.msra.mxu0 0.0
  %2255 = vmatprep.subr.mxu0 0.0
  %2256 = vmatpush1.msra.mxu0 0.0
  %2257 = vmatprep.subr.mxu0 0.0
  %2258 = vmatpush1.msra.mxu0 0.0
  %2259 = vmatprep.subr.mxu0 0.0
  %2260 = vmatpush1.msra.mxu0 0.0
  %2261 = vmatprep.subr.mxu0 0.0
  %2262 = vmatpush1.msra.mxu0 0.0
  %2263 = vmatprep.subr.mxu0 0.0
  %2264 = vmatpush1.msra.mxu0 0.0
  %2265 = vmatprep.subr.mxu0 0.0
  %2266 = vmatpush1.msra.mxu0 0.0
  %2267 = vmatprep.subr.mxu0 0.0
  %2268 = vmatpush1.msra.mxu0 0.0
  %2269 = vmatprep.subr.mxu0 0.0
  %2270 = vmatpush1.msra.mxu0 0.0
  %2271 = vmatprep.subr.mxu0 0.0
  %2272 = vmatpush1.msra.mxu0 0.0
  %2273 = vmatprep.subr.mxu0 0.0
  %2274 = vmatpush1.msra.mxu0 0.0
  %2275 = vmatprep.subr.mxu0 0.0
  %2276 = vmatpush1.msra.mxu0 0.0
  %2277 = vmatprep.subr.mxu0 0.0
  %2278 = vmatpush1.msra.mxu0 0.0
  %2279 = vmatprep.subr.mxu0 0.0
  %2280 = vmatpush1.msra.mxu0 0.0
  %2281 = vmatprep.subr.mxu0 0.0
  %2282 = vmatpush1.msra.mxu0 0.0
  %2283 = vmatprep.subr.mxu0 0.0
  %2284 = vmatpush1.msra.mxu0 0.0
  %2285 = vmatprep.mubr.f32.mxu0 0.0
  %2286 = vmatmul.mubr.f32.gmra.mrb[0].mxu0 %v2219
  %v2287 = vpop.f32.mrb[0].mxu0
  %v2288 = vadd.f32 %v2213, %v2287
  %v2289 = vpop.f32.mrb[0].mxu0
  %2290 = vdwg.mxu0
  %v2291 = vadd.f32 %v2288, %v193
  %v2292 = vmul.f32 %v2291, %v200
  %v2293 = vtanh.pop %v2292
  %v2294 = vmul.f32 %v200, %v2293
  %v2295 = vadd.f32 %v2294, %v201
  %v2296 = vmul.f32 %v2295, %v2042
  %2298 = vrot.lane.b32.xlu0 %v2295, 96
  %v2299 = vpop.permute.xlu0 %2298
  %v2301 = vmul.f32 %v2295, %v2299
  %2303 = vrot.lane.b32.xlu0 %v2301, 16
  %v2304 = vpop.permute.xlu0 %2303
  %v2306 = vadd.f32 %v2296, %v2304
  %v2307 = vtanh.pop %v2306
  %2309 = vrot.lane.b32.xlu0 %v2307, 32
  %v2310 = vpop.permute.xlu0 %2309
  %v2312 = vmul.f32 %v2295, %v2310
  %v2313 = vld [vmem:[%s7] sm:$0xff]
  %v2314 = vld [vmem:[%s7 + $0x8] sm:$0xff]
  %v2315 = vld [vmem:[%s8] sm:$0x1]
  %v2317 = vlaneseq
  %v2318 = vshrl.u32 %v2317, 7
  %v2319 = vsub.s32 0, %v2318
  %v2320 = vrot.slane %v2315, %v2319
  %2323 = vrot.lane.b32.xlu0 %v2312, 80
  %v2324 = vpop.permute.xlu0 %2323
  %v2325 = vsel %vm202, %v2324, 0
  %2327 = vmatprep.subr.mxu0 0.0
  %2328 = vmatpush1.msra.mxu0 %v2313
  %2329 = vmatprep.subr.mxu0 0.0
  %2330 = vmatpush1.msra.mxu0 %v2314
  %2331 = vmatprep.subr.mxu0 0.0
  %2332 = vmatpush1.msra.mxu0 0.0
  %2333 = vmatprep.subr.mxu0 0.0
  %2334 = vmatpush1.msra.mxu0 0.0
  %2335 = vmatprep.subr.mxu0 0.0
  %2336 = vmatpush1.msra.mxu0 0.0
  %2337 = vmatprep.subr.mxu0 0.0
  %2338 = vmatpush1.msra.mxu0 0.0
  %2339 = vmatprep.subr.mxu0 0.0
  %2340 = vmatpush1.msra.mxu0 0.0
  %2341 = vmatprep.subr.mxu0 0.0
  %2342 = vmatpush1.msra.mxu0 0.0
  %2343 = vmatprep.subr.mxu0 0.0
  %2344 = vmatpush1.msra.mxu0 0.0
  %2345 = vmatprep.subr.mxu0 0.0
  %2346 = vmatpush1.msra.mxu0 0.0
  %2347 = vmatprep.subr.mxu0 0.0
  %2348 = vmatpush1.msra.mxu0 0.0
  %2349 = vmatprep.subr.mxu0 0.0
  %2350 = vmatpush1.msra.mxu0 0.0
  %2351 = vmatprep.subr.mxu0 0.0
  %2352 = vmatpush1.msra.mxu0 0.0
  %2353 = vmatprep.subr.mxu0 0.0
  %2354 = vmatpush1.msra.mxu0 0.0
  %2355 = vmatprep.subr.mxu0 0.0
  %2356 = vmatpush1.msra.mxu0 0.0
  %2357 = vmatprep.subr.mxu0 0.0
  %2358 = vmatpush1.msra.mxu0 0.0
  %2359 = vmatprep.subr.mxu0 0.0
  %2360 = vmatpush1.msra.mxu0 0.0
  %2361 = vmatprep.subr.mxu0 0.0
  %2362 = vmatpush1.msra.mxu0 0.0
  %2363 = vmatprep.subr.mxu0 0.0
  %2364 = vmatpush1.msra.mxu0 0.0
  %2365 = vmatprep.subr.mxu0 0.0
  %2366 = vmatpush1.msra.mxu0 0.0
  %2367 = vmatprep.subr.mxu0 0.0
  %2368 = vmatpush1.msra.mxu0 0.0
  %2369 = vmatprep.subr.mxu0 0.0
  %2370 = vmatpush1.msra.mxu0 0.0
  %2371 = vmatprep.subr.mxu0 0.0
  %2372 = vmatpush1.msra.mxu0 0.0
  %2373 = vmatprep.subr.mxu0 0.0
  %2374 = vmatpush1.msra.mxu0 0.0
  %2375 = vmatprep.subr.mxu0 0.0
  %2376 = vmatpush1.msra.mxu0 0.0
  %2377 = vmatprep.subr.mxu0 0.0
  %2378 = vmatpush1.msra.mxu0 0.0
  %2379 = vmatprep.subr.mxu0 0.0
  %2380 = vmatpush1.msra.mxu0 0.0
  %2381 = vmatprep.subr.mxu0 0.0
  %2382 = vmatpush1.msra.mxu0 0.0
  %2383 = vmatprep.subr.mxu0 0.0
  %2384 = vmatpush1.msra.mxu0 0.0
  %2385 = vmatprep.subr.mxu0 0.0
  %2386 = vmatpush1.msra.mxu0 0.0
  %2387 = vmatprep.subr.mxu0 0.0
  %2388 = vmatpush1.msra.mxu0 0.0
  %2389 = vmatprep.subr.mxu0 0.0
  %2390 = vmatpush1.msra.mxu0 0.0
  %2391 = vmatprep.mubr.f32.mxu0 0.0
  %2392 = vmatmul.mubr.f32.gmra.mrb[0].mxu0 %v2325
  %v2393 = vpop.f32.mrb[0].mxu0
  %v2394 = vadd.f32 %v2320, %v2393
  %v2395 = vpop.f32.mrb[0].mxu0
  %2396 = vdwg.mxu0
  %2397 = vst [vmem:[%s9] sm:$0xff] %v2394
  // Predicated region
  $region38: #{lstm_model_forward.1} parent=0 // pred_check
    _
  $region39: #{lstm_model_forward.1} parent=0 // pred_check_branch
    %2399 = sbr.rel (0) target = $region41
  $region40: #{lstm_model_forward.1} parent=0 // pred_region
    _
  $region41: #{lstm_model_forward.1} parent=0 // pred_fallthru
    _
  // Predicated region
  $region42: #{lstm_model_forward.1} parent=0 // pred_check
    _
  $region43: #{lstm_model_forward.1} parent=0 // pred_check_branch
    %2401 = sbr.rel (0) target = $region45
  $region44: #{lstm_model_forward.1} parent=0 // pred_region
    _
  $region45: #{lstm_model_forward.1} parent=0 // pred_fallthru
    _

</llo_original>
